<compile_context>
chip_gen: v5e
topology: v5e:2x2
jax: 0.10.0
libtpu: 0.0.40
codegen_flags: <defaults>
</compile_context>

<pallas_src>
import jax
import jax.numpy as jnp
from jax.experimental import pallas as pl
from jax.experimental.pallas import tpu as pltpu


# ---------------------------------------------------------------------------
# Fused Pallas kernel: one-hot gather + GRU + policy + reparameterisation
# ---------------------------------------------------------------------------

def fused_actor_kernel(tokens_ref,      # VMEM (B, T) int32
                       emb_wih_ref,     # VMEM (V, 3H)   pre-multiplied embedding @ W_ih
                       whh_ref,         # VMEM (H, 3H)   tight gate packing [r|z|n]
                       bih_ref,         # VMEM (1, 3H)   f32
                       bhh_ref,         # VMEM (1, 3H)   f32
                       bsdb_ref,        # VMEM (B, BS+DB) f32
                       wp_bsdb_ref,     # VMEM (BS+DB, 2Y) [mu|logvar]
                       wp_h_ref,        # VMEM (H, 2Y)     [mu|logvar]
                       bp_ref,          # VMEM (1, 2Y)   f32
                       eps_ref,         # VMEM (NZ, B, Y) f32
                       z_ref,           # out  (NZ, B, Y) f32
                       mu_ref,          # out  (B, Y) f32
                       lv_ref):         # out  (B, Y) f32
    B, T = tokens_ref.shape
    V, H3 = emb_wih_ref.shape
    H = whh_ref.shape[0]
    NZ = eps_ref.shape[0]
    Y = mu_ref.shape[-1]
    mm_dtype = emb_wih_ref.dtype                     # matmul operand dtype (bf16/f32)

    tok = tokens_ref[...]                            # (B, T) i32
    emb_wih = emb_wih_ref[...]                       # (V, 3H)
    whh = whh_ref[...]                               # (H, 3H)
    bih = bih_ref[...]                               # (1, 3H) f32
    bhh = bhh_ref[...]                               # (1, 3H) f32

    # --- 1+2) Embedding gather fused with the input projection -----------------
    # one-hot(tokens_t) @ (embedding @ W_ih): one small MXU dot per timestep.
    # These do not depend on h, so the scheduler overlaps them with the
    # serialized recurrence below.
    vocab_iota = jax.lax.broadcasted_iota(jnp.int32, (B, V), 1)
    gi_steps = []
    for t in range(T):                               # T static & small -> unrolled
        onehot = jnp.where(vocab_iota == tok[:, t:t + 1], 1.0, 0.0).astype(mm_dtype)
        gi_steps.append(
            jnp.dot(onehot, emb_wih, preferred_element_type=jnp.float32) + bih)

    # --- 3) GRU recurrence: only h @ W_hh stays on the serial path --------------
    # Tight 3H packing -> a single MXU result tile per step; gate slices are
    # 32-lane sub-slices (lane ops in a different VLIW slot). Gate math in f32.
    h = jnp.zeros((B, H), jnp.float32)
    for t in range(T):
        gi = gi_steps[t]                                               # (B, 3H) f32
        gh = jnp.dot(h.astype(mm_dtype), whh,
                     preferred_element_type=jnp.float32) + bhh         # (B, 3H) f32
        r = jax.nn.sigmoid(gi[:, 0:H] + gh[:, 0:H])
        zg = jax.nn.sigmoid(gi[:, H:2 * H] + gh[:, H:2 * H])
        n = jnp.tanh(gi[:, 2 * H:3 * H] + r * gh[:, 2 * H:3 * H])
        h = (1.0 - zg) * n + zg * h
    # NOTE: no sequence-length masking (matches reference / original usage).

    # --- 4) Policy (concat-free, mu|logvar fused) + reparameterisation ----------
    mulv = (jnp.dot(bsdb_ref[...].astype(mm_dtype), wp_bsdb_ref[...],
                    preferred_element_type=jnp.float32)
            + jnp.dot(h.astype(mm_dtype), wp_h_ref[...],
                      preferred_element_type=jnp.float32)
            + bp_ref[...])                                             # (B, 2Y)
    mu = mulv[:, 0:Y]
    lv = mulv[:, Y:2 * Y]
    mu_ref[...] = mu
    lv_ref[...] = lv
    sigma = jnp.exp(0.5 * lv)
    for i in range(NZ):                               # NZ static (usually 1)
        z_ref[i] = mu + sigma * eps_ref[i]


# ---------------------------------------------------------------------------
# Wrapper
# ---------------------------------------------------------------------------

def _vmem():
    return pl.BlockSpec(memory_space=pltpu.MemorySpace.VMEM)


@jax.jit
def stochastic_gaussian_actor_forward(packed, tokens, bs_label, db_label, eps):
    """tokens (B,T) int32; bs (B,BS); db (B,DB); eps (NZ,B,Y).
    Returns (z, q_mu, q_logvar), z of shape (NZ, B, Y)."""
    B, T = tokens.shape
    NZ, _, Y = eps.shape
    V, H3 = packed["emb_wih"].shape
    H = packed["w_hh"].shape[0]
    Dbsdb = packed["wp_bsdb"].shape[0]
    Y2 = packed["bp"].shape[1]

    # Only wrapper-side glue: one tiny concat (no padding, no output slicing).
    bsdb = jnp.concatenate([bs_label.astype(jnp.float32),
                            db_label.astype(jnp.float32)], axis=1)     # (B, BS+DB)

    flops = 2 * B * (T * V * H3 + T * H * H3 + (Dbsdb + H) * Y2)
    transcendentals = B * (T * H3 + Y)
    bytes_accessed = (
        4 * (tokens.size + bsdb.size + eps.size + (NZ + 2) * B * Y)
        + sum(int(v.size) * v.dtype.itemsize for v in packed.values()))

    out_shapes = (
        jax.ShapeDtypeStruct((NZ, B, Y), jnp.float32),   # z
        jax.ShapeDtypeStruct((B, Y), jnp.float32),       # q_mu
        jax.ShapeDtypeStruct((B, Y), jnp.float32),       # q_logvar
    )

    z, mu, lv = pl.pallas_call(
        fused_actor_kernel,
        out_shape=out_shapes,
        in_specs=[_vmem()] * 10,
        out_specs=(_vmem(), _vmem(), _vmem()),
        compiler_params=pltpu.CompilerParams(vmem_limit_bytes=4 * 1024 * 1024),
        cost_estimate=pl.CostEstimate(flops=flops,
                                      transcendentals=transcendentals,
                                      bytes_accessed=bytes_accessed),
    )(tokens, packed["emb_wih"], packed["w_hh"], packed["b_ih"], packed["b_hh"],
      bsdb, packed["wp_bsdb"], packed["wp_h"], packed["bp"], eps)

    return z, mu, lv


# ---------------------------------------------------------------------------
# Parameters: natural (PyTorch-shaped) init + one-time TPU re-layout
# ---------------------------------------------------------------------------

def init_params(key, *, vocab_size, embed_size, hidden_size, bs_size, db_size, y_size):
    keys = jax.random.split(key, 9)
    u = lambda k, shape, scale: jax.random.uniform(k, shape, jnp.float32, -scale, scale)
    D = bs_size + db_size + hidden_size
    return dict(
        embedding=u(keys[0], (vocab_size, embed_size), 0.1),
        w_ih=u(keys[1], (embed_size, 3 * hidden_size), 0.1),
        w_hh=u(keys[2], (hidden_size, 3 * hidden_size), 0.1),
        b_ih=u(keys[3], (1, 3 * hidden_size), 0.1),
        b_hh=u(keys[4], (1, 3 * hidden_size), 0.1),
        w_mu=u(keys[5], (D, y_size), 0.1),
        b_mu=u(keys[6], (1, y_size), 0.1),
        w_lv=u(keys[7], (D, y_size), 0.1),
        b_lv=u(keys[8], (1, y_size), 0.1),
    )


def pack_params(params, *, bs_size, db_size, matmul_dtype=jnp.bfloat16):
    """One-time TPU-friendly re-layout:
      * emb_wih = embedding @ W_ih (V, 3H): the in-kernel one-hot gather selects
        rows of this product, fusing the embedding lookup with the GRU input
        projection and removing the (V,1,E) VMEM-inflated table.
      * tight 3H gate packing (one MXU result tile per recurrent step).
      * [mu|logvar]-fused, concat-free policy head split into bs|db and h blocks.
      * matmul operands stored in `matmul_dtype` (bf16 is MXU-native on v6e/v7x);
        biases stay f32 and all elementwise gate math runs in f32."""
    s1 = bs_size + db_size
    emb_wih = params["embedding"] @ params["w_ih"]                      # (V, 3H) f32
    return dict(
        emb_wih=emb_wih.astype(matmul_dtype),
        w_hh=params["w_hh"].astype(matmul_dtype),
        b_ih=params["b_ih"].astype(jnp.float32),
        b_hh=params["b_hh"].astype(jnp.float32),
        wp_bsdb=jnp.concatenate([params["w_mu"][:s1], params["w_lv"][:s1]],
                                axis=1).astype(matmul_dtype),
        wp_h=jnp.concatenate([params["w_mu"][s1:], params["w_lv"][s1:]],
                             axis=1).astype(matmul_dtype),
        bp=jnp.concatenate([params["b_mu"], params["b_lv"]],
                           axis=1).astype(jnp.float32),
    )


# ---------------------------------------------------------------------------
# Pure-JAX reference (natural f32 weights) for correctness check
# ---------------------------------------------------------------------------

def reference_forward(params, tokens, bs_label, db_label, eps):
    emb = params["embedding"][tokens]                   # (B, T, E)
    B, T, _ = emb.shape
    H = params["w_hh"].shape[0]
    h = jnp.zeros((B, H), jnp.float32)
    for t in range(T):
        x_t = emb[:, t, :]
        gi = x_t @ params["w_ih"] + params["b_ih"]
        gh = h @ params["w_hh"] + params["b_hh"]
        r = jax.nn.sigmoid(gi[:, :H] + gh[:, :H])
        z = jax.nn.sigmoid(gi[:, H:2 * H] + gh[:, H:2 * H])
        n = jnp.tanh(gi[:, 2 * H:] + r * gh[:, 2 * H:])
        h = (1.0 - z) * n + z * h
    enc = jnp.concatenate([bs_label, db_label, h], axis=1)
    mu = enc @ params["w_mu"] + params["b_mu"]
    lv = enc @ params["w_lv"] + params["b_lv"]
    zz = mu + jnp.exp(0.5 * lv) * eps
    return zz, mu, lv


# ---------------------------------------------------------------------------
# Main
# ---------------------------------------------------------------------------

if __name__ == "__main__":
    B, T = 2, 8           # batch, short-context utterance length
    VOCAB = 64
    EMBED = 32
    HIDDEN = 32           # utt_cell_size -> utt_summary dim
    BS, DB = 8, 8         # bs_size, db_size
    Y = 16                # config.y_size
    N_Z = 1

    MM_DTYPE = jnp.bfloat16                    # MXU-native operands on v6e/v7x
    ATOL = 2e-2 if MM_DTYPE == jnp.bfloat16 else 1e-4

    root = jax.random.PRNGKey(0)
    k_param, k_tok, k_bs, k_db, k_eps = jax.random.split(root, 5)

    params = init_params(k_param, vocab_size=VOCAB, embed_size=EMBED,
                         hidden_size=HIDDEN, bs_size=BS, db_size=DB, y_size=Y)
    packed = pack_params(params, bs_size=BS, db_size=DB, matmul_dtype=MM_DTYPE)

    tokens = jax.random.randint(k_tok, (B, T), 0, VOCAB, dtype=jnp.int32)
    bs_label = jax.random.uniform(k_bs, (B, BS), jnp.float32)
    db_label = jax.random.uniform(k_db, (B, DB), jnp.float32)
    eps = jax.random.normal(k_eps, (N_Z, B, Y), jnp.float32)

    z_all, q_mu, q_logvar = stochastic_gaussian_actor_forward(
        packed, tokens, bs_label, db_label, eps)
    jax.block_until_ready((z_all, q_mu, q_logvar))
    z = z_all[0] if N_Z == 1 else list(z_all)   # original module: list iff n_z > 1

    # Validate against the pure-JAX f32 reference (bf16 MXU operands -> relaxed atol).
    z_ref, mu_ref, lv_ref = reference_forward(params, tokens, bs_label, db_label, eps[0])
    assert q_mu.shape == (B, Y) and q_logvar.shape == (B, Y) and z.shape == (B, Y)
    assert jnp.allclose(q_mu, mu_ref, atol=ATOL), \
        f"q_mu mismatch (max err {float(jnp.max(jnp.abs(q_mu - mu_ref))):.2e})"
    assert jnp.allclose(q_logvar, lv_ref, atol=ATOL), \
        f"q_logvar mismatch (max err {float(jnp.max(jnp.abs(q_logvar - lv_ref))):.2e})"
    assert jnp.allclose(z, z_ref, atol=ATOL), \
        f"z mismatch (max err {float(jnp.max(jnp.abs(z - z_ref))):.2e})"

    print("KERNEL_OK")
</pallas_src>

<mosaic_0001>
module attributes {stable_mosaic.version = 11 : i64} {
  func.func @fused_actor_kernel(%arg0: memref<2x8xi32, #tpu.memory_space<vmem>>, %arg1: memref<64x96xbf16, #tpu.memory_space<vmem>>, %arg2: memref<32x96xbf16, #tpu.memory_space<vmem>>, %arg3: memref<1x96xf32, #tpu.memory_space<vmem>>, %arg4: memref<1x96xf32, #tpu.memory_space<vmem>>, %arg5: memref<2x16xf32, #tpu.memory_space<vmem>>, %arg6: memref<16x32xbf16, #tpu.memory_space<vmem>>, %arg7: memref<32x32xbf16, #tpu.memory_space<vmem>>, %arg8: memref<1x32xf32, #tpu.memory_space<vmem>>, %arg9: memref<1x2x16xf32, #tpu.memory_space<vmem>>, %arg10: memref<1x2x16xf32, #tpu.memory_space<vmem>>, %arg11: memref<2x16xf32, #tpu.memory_space<vmem>>, %arg12: memref<2x16xf32, #tpu.memory_space<vmem>>) attributes {dimension_semantics = [], scalar_prefetch = 0 : i64, scratch_operands = 0 : i64, tpu.core_type = #tpu.core_type<tc>} {
    %c0 = arith.constant 0 : index
    %c0_0 = arith.constant 0 : index
    %0 = vector.load %arg0[%c0, %c0_0] : memref<2x8xi32, #tpu.memory_space<vmem>>, vector<2x8xi32>
    %c0_1 = arith.constant 0 : index
    %c0_2 = arith.constant 0 : index
    %1 = vector.load %arg1[%c0_1, %c0_2] : memref<64x96xbf16, #tpu.memory_space<vmem>>, vector<64x96xbf16>
    %c0_3 = arith.constant 0 : index
    %c0_4 = arith.constant 0 : index
    %2 = vector.load %arg2[%c0_3, %c0_4] : memref<32x96xbf16, #tpu.memory_space<vmem>>, vector<32x96xbf16>
    %c0_5 = arith.constant 0 : index
    %c0_6 = arith.constant 0 : index
    %3 = vector.load %arg3[%c0_5, %c0_6] : memref<1x96xf32, #tpu.memory_space<vmem>>, vector<1x96xf32>
    %c0_7 = arith.constant 0 : index
    %c0_8 = arith.constant 0 : index
    %4 = vector.load %arg4[%c0_7, %c0_8] : memref<1x96xf32, #tpu.memory_space<vmem>>, vector<1x96xf32>
    %5 = tpu.iota {dimensions = array<i32: 1>} : vector<2x64xi32>
    %6 = vector.extract_strided_slice %0 {offsets = [0, 0], sizes = [2, 1], strides = [1, 1]} : vector<2x8xi32> to vector<2x1xi32>
    %7 = vector.broadcast %6 : vector<2x1xi32> to vector<2x64xi32>
    %8 = arith.cmpi eq, %5, %7 : vector<2x64xi32>
    %cst = arith.constant 1.000000e+00 : f32
    %cst_9 = arith.constant 0.000000e+00 : f32
    %9 = vector.broadcast %cst : f32 to vector<2x64xf32>
    %10 = vector.broadcast %cst_9 : f32 to vector<2x64xf32>
    %11 = arith.select %8, %9, %10 : vector<2x64xi1>, vector<2x64xf32>
    %12 = arith.truncf %11 : vector<2x64xf32> to vector<2x64xbf16>
    %cst_10 = arith.constant dense<0.000000e+00> : vector<2x96xf32>
    %13 = tpu.matmul %12, %1, %cst_10 {dimension_numbers = #tpu.dot_dimension_numbers<[1], [0], [0], [1], [0, 0, 1, 1], [], []>} : vector<2x64xbf16>, vector<64x96xbf16>, vector<2x96xf32> -> vector<2x96xf32>
    %14 = vector.broadcast %3 : vector<1x96xf32> to vector<2x96xf32>
    %15 = arith.addf %13, %14 : vector<2x96xf32>
    %16 = vector.extract_strided_slice %0 {offsets = [0, 1], sizes = [2, 1], strides = [1, 1]} : vector<2x8xi32> to vector<2x1xi32>
    %17 = vector.broadcast %16 : vector<2x1xi32> to vector<2x64xi32>
    %18 = arith.cmpi eq, %5, %17 : vector<2x64xi32>
    %cst_11 = arith.constant 1.000000e+00 : f32
    %cst_12 = arith.constant 0.000000e+00 : f32
    %19 = vector.broadcast %cst_11 : f32 to vector<2x64xf32>
    %20 = vector.broadcast %cst_12 : f32 to vector<2x64xf32>
    %21 = arith.select %18, %19, %20 : vector<2x64xi1>, vector<2x64xf32>
    %22 = arith.truncf %21 : vector<2x64xf32> to vector<2x64xbf16>
    %cst_13 = arith.constant dense<0.000000e+00> : vector<2x96xf32>
    %23 = tpu.matmul %22, %1, %cst_13 {dimension_numbers = #tpu.dot_dimension_numbers<[1], [0], [0], [1], [0, 0, 1, 1], [], []>} : vector<2x64xbf16>, vector<64x96xbf16>, vector<2x96xf32> -> vector<2x96xf32>
    %24 = vector.broadcast %3 : vector<1x96xf32> to vector<2x96xf32>
    %25 = arith.addf %23, %24 : vector<2x96xf32>
    %26 = vector.extract_strided_slice %0 {offsets = [0, 2], sizes = [2, 1], strides = [1, 1]} : vector<2x8xi32> to vector<2x1xi32>
    %27 = vector.broadcast %26 : vector<2x1xi32> to vector<2x64xi32>
    %28 = arith.cmpi eq, %5, %27 : vector<2x64xi32>
    %cst_14 = arith.constant 1.000000e+00 : f32
    %cst_15 = arith.constant 0.000000e+00 : f32
    %29 = vector.broadcast %cst_14 : f32 to vector<2x64xf32>
    %30 = vector.broadcast %cst_15 : f32 to vector<2x64xf32>
    %31 = arith.select %28, %29, %30 : vector<2x64xi1>, vector<2x64xf32>
    %32 = arith.truncf %31 : vector<2x64xf32> to vector<2x64xbf16>
    %cst_16 = arith.constant dense<0.000000e+00> : vector<2x96xf32>
    %33 = tpu.matmul %32, %1, %cst_16 {dimension_numbers = #tpu.dot_dimension_numbers<[1], [0], [0], [1], [0, 0, 1, 1], [], []>} : vector<2x64xbf16>, vector<64x96xbf16>, vector<2x96xf32> -> vector<2x96xf32>
    %34 = vector.broadcast %3 : vector<1x96xf32> to vector<2x96xf32>
    %35 = arith.addf %33, %34 : vector<2x96xf32>
    %36 = vector.extract_strided_slice %0 {offsets = [0, 3], sizes = [2, 1], strides = [1, 1]} : vector<2x8xi32> to vector<2x1xi32>
    %37 = vector.broadcast %36 : vector<2x1xi32> to vector<2x64xi32>
    %38 = arith.cmpi eq, %5, %37 : vector<2x64xi32>
    %cst_17 = arith.constant 1.000000e+00 : f32
    %cst_18 = arith.constant 0.000000e+00 : f32
    %39 = vector.broadcast %cst_17 : f32 to vector<2x64xf32>
    %40 = vector.broadcast %cst_18 : f32 to vector<2x64xf32>
    %41 = arith.select %38, %39, %40 : vector<2x64xi1>, vector<2x64xf32>
    %42 = arith.truncf %41 : vector<2x64xf32> to vector<2x64xbf16>
    %cst_19 = arith.constant dense<0.000000e+00> : vector<2x96xf32>
    %43 = tpu.matmul %42, %1, %cst_19 {dimension_numbers = #tpu.dot_dimension_numbers<[1], [0], [0], [1], [0, 0, 1, 1], [], []>} : vector<2x64xbf16>, vector<64x96xbf16>, vector<2x96xf32> -> vector<2x96xf32>
    %44 = vector.broadcast %3 : vector<1x96xf32> to vector<2x96xf32>
    %45 = arith.addf %43, %44 : vector<2x96xf32>
    %46 = vector.extract_strided_slice %0 {offsets = [0, 4], sizes = [2, 1], strides = [1, 1]} : vector<2x8xi32> to vector<2x1xi32>
    %47 = vector.broadcast %46 : vector<2x1xi32> to vector<2x64xi32>
    %48 = arith.cmpi eq, %5, %47 : vector<2x64xi32>
    %cst_20 = arith.constant 1.000000e+00 : f32
    %cst_21 = arith.constant 0.000000e+00 : f32
    %49 = vector.broadcast %cst_20 : f32 to vector<2x64xf32>
    %50 = vector.broadcast %cst_21 : f32 to vector<2x64xf32>
    %51 = arith.select %48, %49, %50 : vector<2x64xi1>, vector<2x64xf32>
    %52 = arith.truncf %51 : vector<2x64xf32> to vector<2x64xbf16>
    %cst_22 = arith.constant dense<0.000000e+00> : vector<2x96xf32>
    %53 = tpu.matmul %52, %1, %cst_22 {dimension_numbers = #tpu.dot_dimension_numbers<[1], [0], [0], [1], [0, 0, 1, 1], [], []>} : vector<2x64xbf16>, vector<64x96xbf16>, vector<2x96xf32> -> vector<2x96xf32>
    %54 = vector.broadcast %3 : vector<1x96xf32> to vector<2x96xf32>
    %55 = arith.addf %53, %54 : vector<2x96xf32>
    %56 = vector.extract_strided_slice %0 {offsets = [0, 5], sizes = [2, 1], strides = [1, 1]} : vector<2x8xi32> to vector<2x1xi32>
    %57 = vector.broadcast %56 : vector<2x1xi32> to vector<2x64xi32>
    %58 = arith.cmpi eq, %5, %57 : vector<2x64xi32>
    %cst_23 = arith.constant 1.000000e+00 : f32
    %cst_24 = arith.constant 0.000000e+00 : f32
    %59 = vector.broadcast %cst_23 : f32 to vector<2x64xf32>
    %60 = vector.broadcast %cst_24 : f32 to vector<2x64xf32>
    %61 = arith.select %58, %59, %60 : vector<2x64xi1>, vector<2x64xf32>
    %62 = arith.truncf %61 : vector<2x64xf32> to vector<2x64xbf16>
    %cst_25 = arith.constant dense<0.000000e+00> : vector<2x96xf32>
    %63 = tpu.matmul %62, %1, %cst_25 {dimension_numbers = #tpu.dot_dimension_numbers<[1], [0], [0], [1], [0, 0, 1, 1], [], []>} : vector<2x64xbf16>, vector<64x96xbf16>, vector<2x96xf32> -> vector<2x96xf32>
    %64 = vector.broadcast %3 : vector<1x96xf32> to vector<2x96xf32>
    %65 = arith.addf %63, %64 : vector<2x96xf32>
    %66 = vector.extract_strided_slice %0 {offsets = [0, 6], sizes = [2, 1], strides = [1, 1]} : vector<2x8xi32> to vector<2x1xi32>
    %67 = vector.broadcast %66 : vector<2x1xi32> to vector<2x64xi32>
    %68 = arith.cmpi eq, %5, %67 : vector<2x64xi32>
    %cst_26 = arith.constant 1.000000e+00 : f32
    %cst_27 = arith.constant 0.000000e+00 : f32
    %69 = vector.broadcast %cst_26 : f32 to vector<2x64xf32>
    %70 = vector.broadcast %cst_27 : f32 to vector<2x64xf32>
    %71 = arith.select %68, %69, %70 : vector<2x64xi1>, vector<2x64xf32>
    %72 = arith.truncf %71 : vector<2x64xf32> to vector<2x64xbf16>
    %cst_28 = arith.constant dense<0.000000e+00> : vector<2x96xf32>
    %73 = tpu.matmul %72, %1, %cst_28 {dimension_numbers = #tpu.dot_dimension_numbers<[1], [0], [0], [1], [0, 0, 1, 1], [], []>} : vector<2x64xbf16>, vector<64x96xbf16>, vector<2x96xf32> -> vector<2x96xf32>
    %74 = vector.broadcast %3 : vector<1x96xf32> to vector<2x96xf32>
    %75 = arith.addf %73, %74 : vector<2x96xf32>
    %76 = vector.extract_strided_slice %0 {offsets = [0, 7], sizes = [2, 1], strides = [1, 1]} : vector<2x8xi32> to vector<2x1xi32>
    %77 = vector.broadcast %76 : vector<2x1xi32> to vector<2x64xi32>
    %78 = arith.cmpi eq, %5, %77 : vector<2x64xi32>
    %cst_29 = arith.constant 1.000000e+00 : f32
    %cst_30 = arith.constant 0.000000e+00 : f32
    %79 = vector.broadcast %cst_29 : f32 to vector<2x64xf32>
    %80 = vector.broadcast %cst_30 : f32 to vector<2x64xf32>
    %81 = arith.select %78, %79, %80 : vector<2x64xi1>, vector<2x64xf32>
    %82 = arith.truncf %81 : vector<2x64xf32> to vector<2x64xbf16>
    %cst_31 = arith.constant dense<0.000000e+00> : vector<2x96xf32>
    %83 = tpu.matmul %82, %1, %cst_31 {dimension_numbers = #tpu.dot_dimension_numbers<[1], [0], [0], [1], [0, 0, 1, 1], [], []>} : vector<2x64xbf16>, vector<64x96xbf16>, vector<2x96xf32> -> vector<2x96xf32>
    %84 = vector.broadcast %3 : vector<1x96xf32> to vector<2x96xf32>
    %85 = arith.addf %83, %84 : vector<2x96xf32>
    %cst_32 = arith.constant 0.000000e+00 : f32
    %86 = vector.broadcast %cst_32 : f32 to vector<2x32xf32>
    %87 = arith.truncf %86 : vector<2x32xf32> to vector<2x32xbf16>
    %cst_33 = arith.constant dense<0.000000e+00> : vector<2x96xf32>
    %88 = tpu.matmul %87, %2, %cst_33 {dimension_numbers = #tpu.dot_dimension_numbers<[1], [0], [0], [1], [0, 0, 1, 1], [], []>} : vector<2x32xbf16>, vector<32x96xbf16>, vector<2x96xf32> -> vector<2x96xf32>
    %89 = vector.broadcast %4 : vector<1x96xf32> to vector<2x96xf32>
    %90 = arith.addf %88, %89 : vector<2x96xf32>
    %91 = vector.extract_strided_slice %15 {offsets = [0, 0], sizes = [2, 32], strides = [1, 1]} : vector<2x96xf32> to vector<2x32xf32>
    %92 = vector.extract_strided_slice %90 {offsets = [0, 0], sizes = [2, 32], strides = [1, 1]} : vector<2x96xf32> to vector<2x32xf32>
    %93 = arith.addf %91, %92 : vector<2x32xf32>
    %94 = arith.negf %93 : vector<2x32xf32>
    %95 = math.exp %94 : vector<2x32xf32>
    %cst_34 = arith.constant 1.000000e+00 : f32
    %96 = vector.broadcast %cst_34 : f32 to vector<2x32xf32>
    %97 = arith.addf %96, %95 : vector<2x32xf32>
    %98 = arith.divf %96, %97 : vector<2x32xf32>
    %99 = vector.extract_strided_slice %15 {offsets = [0, 32], sizes = [2, 32], strides = [1, 1]} : vector<2x96xf32> to vector<2x32xf32>
    %100 = vector.extract_strided_slice %90 {offsets = [0, 32], sizes = [2, 32], strides = [1, 1]} : vector<2x96xf32> to vector<2x32xf32>
    %101 = arith.addf %99, %100 : vector<2x32xf32>
    %102 = arith.negf %101 : vector<2x32xf32>
    %103 = math.exp %102 : vector<2x32xf32>
    %cst_35 = arith.constant 1.000000e+00 : f32
    %104 = vector.broadcast %cst_35 : f32 to vector<2x32xf32>
    %105 = arith.addf %104, %103 : vector<2x32xf32>
    %106 = arith.divf %104, %105 : vector<2x32xf32>
    %107 = vector.extract_strided_slice %15 {offsets = [0, 64], sizes = [2, 32], strides = [1, 1]} : vector<2x96xf32> to vector<2x32xf32>
    %108 = vector.extract_strided_slice %90 {offsets = [0, 64], sizes = [2, 32], strides = [1, 1]} : vector<2x96xf32> to vector<2x32xf32>
    %109 = arith.mulf %98, %108 : vector<2x32xf32>
    %110 = arith.addf %107, %109 : vector<2x32xf32>
    %111 = math.tanh %110 : vector<2x32xf32>
    %cst_36 = arith.constant 1.000000e+00 : f32
    %112 = vector.broadcast %cst_36 : f32 to vector<2x32xf32>
    %113 = arith.subf %112, %106 : vector<2x32xf32>
    %114 = arith.mulf %113, %111 : vector<2x32xf32>
    %115 = arith.mulf %106, %86 : vector<2x32xf32>
    %116 = arith.addf %114, %115 : vector<2x32xf32>
    %117 = arith.truncf %116 : vector<2x32xf32> to vector<2x32xbf16>
    %cst_37 = arith.constant dense<0.000000e+00> : vector<2x96xf32>
    %118 = tpu.matmul %117, %2, %cst_37 {dimension_numbers = #tpu.dot_dimension_numbers<[1], [0], [0], [1], [0, 0, 1, 1], [], []>} : vector<2x32xbf16>, vector<32x96xbf16>, vector<2x96xf32> -> vector<2x96xf32>
    %119 = vector.broadcast %4 : vector<1x96xf32> to vector<2x96xf32>
    %120 = arith.addf %118, %119 : vector<2x96xf32>
    %121 = vector.extract_strided_slice %25 {offsets = [0, 0], sizes = [2, 32], strides = [1, 1]} : vector<2x96xf32> to vector<2x32xf32>
    %122 = vector.extract_strided_slice %120 {offsets = [0, 0], sizes = [2, 32], strides = [1, 1]} : vector<2x96xf32> to vector<2x32xf32>
    %123 = arith.addf %121, %122 : vector<2x32xf32>
    %124 = arith.negf %123 : vector<2x32xf32>
    %125 = math.exp %124 : vector<2x32xf32>
    %cst_38 = arith.constant 1.000000e+00 : f32
    %126 = vector.broadcast %cst_38 : f32 to vector<2x32xf32>
    %127 = arith.addf %126, %125 : vector<2x32xf32>
    %128 = arith.divf %126, %127 : vector<2x32xf32>
    %129 = vector.extract_strided_slice %25 {offsets = [0, 32], sizes = [2, 32], strides = [1, 1]} : vector<2x96xf32> to vector<2x32xf32>
    %130 = vector.extract_strided_slice %120 {offsets = [0, 32], sizes = [2, 32], strides = [1, 1]} : vector<2x96xf32> to vector<2x32xf32>
    %131 = arith.addf %129, %130 : vector<2x32xf32>
    %132 = arith.negf %131 : vector<2x32xf32>
    %133 = math.exp %132 : vector<2x32xf32>
    %cst_39 = arith.constant 1.000000e+00 : f32
    %134 = vector.broadcast %cst_39 : f32 to vector<2x32xf32>
    %135 = arith.addf %134, %133 : vector<2x32xf32>
    %136 = arith.divf %134, %135 : vector<2x32xf32>
    %137 = vector.extract_strided_slice %25 {offsets = [0, 64], sizes = [2, 32], strides = [1, 1]} : vector<2x96xf32> to vector<2x32xf32>
    %138 = vector.extract_strided_slice %120 {offsets = [0, 64], sizes = [2, 32], strides = [1, 1]} : vector<2x96xf32> to vector<2x32xf32>
    %139 = arith.mulf %128, %138 : vector<2x32xf32>
    %140 = arith.addf %137, %139 : vector<2x32xf32>
    %141 = math.tanh %140 : vector<2x32xf32>
    %cst_40 = arith.constant 1.000000e+00 : f32
    %142 = vector.broadcast %cst_40 : f32 to vector<2x32xf32>
    %143 = arith.subf %142, %136 : vector<2x32xf32>
    %144 = arith.mulf %143, %141 : vector<2x32xf32>
    %145 = arith.mulf %136, %116 : vector<2x32xf32>
    %146 = arith.addf %144, %145 : vector<2x32xf32>
    %147 = arith.truncf %146 : vector<2x32xf32> to vector<2x32xbf16>
    %cst_41 = arith.constant dense<0.000000e+00> : vector<2x96xf32>
    %148 = tpu.matmul %147, %2, %cst_41 {dimension_numbers = #tpu.dot_dimension_numbers<[1], [0], [0], [1], [0, 0, 1, 1], [], []>} : vector<2x32xbf16>, vector<32x96xbf16>, vector<2x96xf32> -> vector<2x96xf32>
    %149 = vector.broadcast %4 : vector<1x96xf32> to vector<2x96xf32>
    %150 = arith.addf %148, %149 : vector<2x96xf32>
    %151 = vector.extract_strided_slice %35 {offsets = [0, 0], sizes = [2, 32], strides = [1, 1]} : vector<2x96xf32> to vector<2x32xf32>
    %152 = vector.extract_strided_slice %150 {offsets = [0, 0], sizes = [2, 32], strides = [1, 1]} : vector<2x96xf32> to vector<2x32xf32>
    %153 = arith.addf %151, %152 : vector<2x32xf32>
    %154 = arith.negf %153 : vector<2x32xf32>
    %155 = math.exp %154 : vector<2x32xf32>
    %cst_42 = arith.constant 1.000000e+00 : f32
    %156 = vector.broadcast %cst_42 : f32 to vector<2x32xf32>
    %157 = arith.addf %156, %155 : vector<2x32xf32>
    %158 = arith.divf %156, %157 : vector<2x32xf32>
    %159 = vector.extract_strided_slice %35 {offsets = [0, 32], sizes = [2, 32], strides = [1, 1]} : vector<2x96xf32> to vector<2x32xf32>
    %160 = vector.extract_strided_slice %150 {offsets = [0, 32], sizes = [2, 32], strides = [1, 1]} : vector<2x96xf32> to vector<2x32xf32>
    %161 = arith.addf %159, %160 : vector<2x32xf32>
    %162 = arith.negf %161 : vector<2x32xf32>
    %163 = math.exp %162 : vector<2x32xf32>
    %cst_43 = arith.constant 1.000000e+00 : f32
    %164 = vector.broadcast %cst_43 : f32 to vector<2x32xf32>
    %165 = arith.addf %164, %163 : vector<2x32xf32>
    %166 = arith.divf %164, %165 : vector<2x32xf32>
    %167 = vector.extract_strided_slice %35 {offsets = [0, 64], sizes = [2, 32], strides = [1, 1]} : vector<2x96xf32> to vector<2x32xf32>
    %168 = vector.extract_strided_slice %150 {offsets = [0, 64], sizes = [2, 32], strides = [1, 1]} : vector<2x96xf32> to vector<2x32xf32>
    %169 = arith.mulf %158, %168 : vector<2x32xf32>
    %170 = arith.addf %167, %169 : vector<2x32xf32>
    %171 = math.tanh %170 : vector<2x32xf32>
    %cst_44 = arith.constant 1.000000e+00 : f32
    %172 = vector.broadcast %cst_44 : f32 to vector<2x32xf32>
    %173 = arith.subf %172, %166 : vector<2x32xf32>
    %174 = arith.mulf %173, %171 : vector<2x32xf32>
    %175 = arith.mulf %166, %146 : vector<2x32xf32>
    %176 = arith.addf %174, %175 : vector<2x32xf32>
    %177 = arith.truncf %176 : vector<2x32xf32> to vector<2x32xbf16>
    %cst_45 = arith.constant dense<0.000000e+00> : vector<2x96xf32>
    %178 = tpu.matmul %177, %2, %cst_45 {dimension_numbers = #tpu.dot_dimension_numbers<[1], [0], [0], [1], [0, 0, 1, 1], [], []>} : vector<2x32xbf16>, vector<32x96xbf16>, vector<2x96xf32> -> vector<2x96xf32>
    %179 = vector.broadcast %4 : vector<1x96xf32> to vector<2x96xf32>
    %180 = arith.addf %178, %179 : vector<2x96xf32>
    %181 = vector.extract_strided_slice %45 {offsets = [0, 0], sizes = [2, 32], strides = [1, 1]} : vector<2x96xf32> to vector<2x32xf32>
    %182 = vector.extract_strided_slice %180 {offsets = [0, 0], sizes = [2, 32], strides = [1, 1]} : vector<2x96xf32> to vector<2x32xf32>
    %183 = arith.addf %181, %182 : vector<2x32xf32>
    %184 = arith.negf %183 : vector<2x32xf32>
    %185 = math.exp %184 : vector<2x32xf32>
    %cst_46 = arith.constant 1.000000e+00 : f32
    %186 = vector.broadcast %cst_46 : f32 to vector<2x32xf32>
    %187 = arith.addf %186, %185 : vector<2x32xf32>
    %188 = arith.divf %186, %187 : vector<2x32xf32>
    %189 = vector.extract_strided_slice %45 {offsets = [0, 32], sizes = [2, 32], strides = [1, 1]} : vector<2x96xf32> to vector<2x32xf32>
    %190 = vector.extract_strided_slice %180 {offsets = [0, 32], sizes = [2, 32], strides = [1, 1]} : vector<2x96xf32> to vector<2x32xf32>
    %191 = arith.addf %189, %190 : vector<2x32xf32>
    %192 = arith.negf %191 : vector<2x32xf32>
    %193 = math.exp %192 : vector<2x32xf32>
    %cst_47 = arith.constant 1.000000e+00 : f32
    %194 = vector.broadcast %cst_47 : f32 to vector<2x32xf32>
    %195 = arith.addf %194, %193 : vector<2x32xf32>
    %196 = arith.divf %194, %195 : vector<2x32xf32>
    %197 = vector.extract_strided_slice %45 {offsets = [0, 64], sizes = [2, 32], strides = [1, 1]} : vector<2x96xf32> to vector<2x32xf32>
    %198 = vector.extract_strided_slice %180 {offsets = [0, 64], sizes = [2, 32], strides = [1, 1]} : vector<2x96xf32> to vector<2x32xf32>
    %199 = arith.mulf %188, %198 : vector<2x32xf32>
    %200 = arith.addf %197, %199 : vector<2x32xf32>
    %201 = math.tanh %200 : vector<2x32xf32>
    %cst_48 = arith.constant 1.000000e+00 : f32
    %202 = vector.broadcast %cst_48 : f32 to vector<2x32xf32>
    %203 = arith.subf %202, %196 : vector<2x32xf32>
    %204 = arith.mulf %203, %201 : vector<2x32xf32>
    %205 = arith.mulf %196, %176 : vector<2x32xf32>
    %206 = arith.addf %204, %205 : vector<2x32xf32>
    %207 = arith.truncf %206 : vector<2x32xf32> to vector<2x32xbf16>
    %cst_49 = arith.constant dense<0.000000e+00> : vector<2x96xf32>
    %208 = tpu.matmul %207, %2, %cst_49 {dimension_numbers = #tpu.dot_dimension_numbers<[1], [0], [0], [1], [0, 0, 1, 1], [], []>} : vector<2x32xbf16>, vector<32x96xbf16>, vector<2x96xf32> -> vector<2x96xf32>
    %209 = vector.broadcast %4 : vector<1x96xf32> to vector<2x96xf32>
    %210 = arith.addf %208, %209 : vector<2x96xf32>
    %211 = vector.extract_strided_slice %55 {offsets = [0, 0], sizes = [2, 32], strides = [1, 1]} : vector<2x96xf32> to vector<2x32xf32>
    %212 = vector.extract_strided_slice %210 {offsets = [0, 0], sizes = [2, 32], strides = [1, 1]} : vector<2x96xf32> to vector<2x32xf32>
    %213 = arith.addf %211, %212 : vector<2x32xf32>
    %214 = arith.negf %213 : vector<2x32xf32>
    %215 = math.exp %214 : vector<2x32xf32>
    %cst_50 = arith.constant 1.000000e+00 : f32
    %216 = vector.broadcast %cst_50 : f32 to vector<2x32xf32>
    %217 = arith.addf %216, %215 : vector<2x32xf32>
    %218 = arith.divf %216, %217 : vector<2x32xf32>
    %219 = vector.extract_strided_slice %55 {offsets = [0, 32], sizes = [2, 32], strides = [1, 1]} : vector<2x96xf32> to vector<2x32xf32>
    %220 = vector.extract_strided_slice %210 {offsets = [0, 32], sizes = [2, 32], strides = [1, 1]} : vector<2x96xf32> to vector<2x32xf32>
    %221 = arith.addf %219, %220 : vector<2x32xf32>
    %222 = arith.negf %221 : vector<2x32xf32>
    %223 = math.exp %222 : vector<2x32xf32>
    %cst_51 = arith.constant 1.000000e+00 : f32
    %224 = vector.broadcast %cst_51 : f32 to vector<2x32xf32>
    %225 = arith.addf %224, %223 : vector<2x32xf32>
    %226 = arith.divf %224, %225 : vector<2x32xf32>
    %227 = vector.extract_strided_slice %55 {offsets = [0, 64], sizes = [2, 32], strides = [1, 1]} : vector<2x96xf32> to vector<2x32xf32>
    %228 = vector.extract_strided_slice %210 {offsets = [0, 64], sizes = [2, 32], strides = [1, 1]} : vector<2x96xf32> to vector<2x32xf32>
    %229 = arith.mulf %218, %228 : vector<2x32xf32>
    %230 = arith.addf %227, %229 : vector<2x32xf32>
    %231 = math.tanh %230 : vector<2x32xf32>
    %cst_52 = arith.constant 1.000000e+00 : f32
    %232 = vector.broadcast %cst_52 : f32 to vector<2x32xf32>
    %233 = arith.subf %232, %226 : vector<2x32xf32>
    %234 = arith.mulf %233, %231 : vector<2x32xf32>
    %235 = arith.mulf %226, %206 : vector<2x32xf32>
    %236 = arith.addf %234, %235 : vector<2x32xf32>
    %237 = arith.truncf %236 : vector<2x32xf32> to vector<2x32xbf16>
    %cst_53 = arith.constant dense<0.000000e+00> : vector<2x96xf32>
    %238 = tpu.matmul %237, %2, %cst_53 {dimension_numbers = #tpu.dot_dimension_numbers<[1], [0], [0], [1], [0, 0, 1, 1], [], []>} : vector<2x32xbf16>, vector<32x96xbf16>, vector<2x96xf32> -> vector<2x96xf32>
    %239 = vector.broadcast %4 : vector<1x96xf32> to vector<2x96xf32>
    %240 = arith.addf %238, %239 : vector<2x96xf32>
    %241 = vector.extract_strided_slice %65 {offsets = [0, 0], sizes = [2, 32], strides = [1, 1]} : vector<2x96xf32> to vector<2x32xf32>
    %242 = vector.extract_strided_slice %240 {offsets = [0, 0], sizes = [2, 32], strides = [1, 1]} : vector<2x96xf32> to vector<2x32xf32>
    %243 = arith.addf %241, %242 : vector<2x32xf32>
    %244 = arith.negf %243 : vector<2x32xf32>
    %245 = math.exp %244 : vector<2x32xf32>
    %cst_54 = arith.constant 1.000000e+00 : f32
    %246 = vector.broadcast %cst_54 : f32 to vector<2x32xf32>
    %247 = arith.addf %246, %245 : vector<2x32xf32>
    %248 = arith.divf %246, %247 : vector<2x32xf32>
    %249 = vector.extract_strided_slice %65 {offsets = [0, 32], sizes = [2, 32], strides = [1, 1]} : vector<2x96xf32> to vector<2x32xf32>
    %250 = vector.extract_strided_slice %240 {offsets = [0, 32], sizes = [2, 32], strides = [1, 1]} : vector<2x96xf32> to vector<2x32xf32>
    %251 = arith.addf %249, %250 : vector<2x32xf32>
    %252 = arith.negf %251 : vector<2x32xf32>
    %253 = math.exp %252 : vector<2x32xf32>
    %cst_55 = arith.constant 1.000000e+00 : f32
    %254 = vector.broadcast %cst_55 : f32 to vector<2x32xf32>
    %255 = arith.addf %254, %253 : vector<2x32xf32>
    %256 = arith.divf %254, %255 : vector<2x32xf32>
    %257 = vector.extract_strided_slice %65 {offsets = [0, 64], sizes = [2, 32], strides = [1, 1]} : vector<2x96xf32> to vector<2x32xf32>
    %258 = vector.extract_strided_slice %240 {offsets = [0, 64], sizes = [2, 32], strides = [1, 1]} : vector<2x96xf32> to vector<2x32xf32>
    %259 = arith.mulf %248, %258 : vector<2x32xf32>
    %260 = arith.addf %257, %259 : vector<2x32xf32>
    %261 = math.tanh %260 : vector<2x32xf32>
    %cst_56 = arith.constant 1.000000e+00 : f32
    %262 = vector.broadcast %cst_56 : f32 to vector<2x32xf32>
    %263 = arith.subf %262, %256 : vector<2x32xf32>
    %264 = arith.mulf %263, %261 : vector<2x32xf32>
    %265 = arith.mulf %256, %236 : vector<2x32xf32>
    %266 = arith.addf %264, %265 : vector<2x32xf32>
    %267 = arith.truncf %266 : vector<2x32xf32> to vector<2x32xbf16>
    %cst_57 = arith.constant dense<0.000000e+00> : vector<2x96xf32>
    %268 = tpu.matmul %267, %2, %cst_57 {dimension_numbers = #tpu.dot_dimension_numbers<[1], [0], [0], [1], [0, 0, 1, 1], [], []>} : vector<2x32xbf16>, vector<32x96xbf16>, vector<2x96xf32> -> vector<2x96xf32>
    %269 = vector.broadcast %4 : vector<1x96xf32> to vector<2x96xf32>
    %270 = arith.addf %268, %269 : vector<2x96xf32>
    %271 = vector.extract_strided_slice %75 {offsets = [0, 0], sizes = [2, 32], strides = [1, 1]} : vector<2x96xf32> to vector<2x32xf32>
    %272 = vector.extract_strided_slice %270 {offsets = [0, 0], sizes = [2, 32], strides = [1, 1]} : vector<2x96xf32> to vector<2x32xf32>
    %273 = arith.addf %271, %272 : vector<2x32xf32>
    %274 = arith.negf %273 : vector<2x32xf32>
    %275 = math.exp %274 : vector<2x32xf32>
    %cst_58 = arith.constant 1.000000e+00 : f32
    %276 = vector.broadcast %cst_58 : f32 to vector<2x32xf32>
    %277 = arith.addf %276, %275 : vector<2x32xf32>
    %278 = arith.divf %276, %277 : vector<2x32xf32>
    %279 = vector.extract_strided_slice %75 {offsets = [0, 32], sizes = [2, 32], strides = [1, 1]} : vector<2x96xf32> to vector<2x32xf32>
    %280 = vector.extract_strided_slice %270 {offsets = [0, 32], sizes = [2, 32], strides = [1, 1]} : vector<2x96xf32> to vector<2x32xf32>
    %281 = arith.addf %279, %280 : vector<2x32xf32>
    %282 = arith.negf %281 : vector<2x32xf32>
    %283 = math.exp %282 : vector<2x32xf32>
    %cst_59 = arith.constant 1.000000e+00 : f32
    %284 = vector.broadcast %cst_59 : f32 to vector<2x32xf32>
    %285 = arith.addf %284, %283 : vector<2x32xf32>
    %286 = arith.divf %284, %285 : vector<2x32xf32>
    %287 = vector.extract_strided_slice %75 {offsets = [0, 64], sizes = [2, 32], strides = [1, 1]} : vector<2x96xf32> to vector<2x32xf32>
    %288 = vector.extract_strided_slice %270 {offsets = [0, 64], sizes = [2, 32], strides = [1, 1]} : vector<2x96xf32> to vector<2x32xf32>
    %289 = arith.mulf %278, %288 : vector<2x32xf32>
    %290 = arith.addf %287, %289 : vector<2x32xf32>
    %291 = math.tanh %290 : vector<2x32xf32>
    %cst_60 = arith.constant 1.000000e+00 : f32
    %292 = vector.broadcast %cst_60 : f32 to vector<2x32xf32>
    %293 = arith.subf %292, %286 : vector<2x32xf32>
    %294 = arith.mulf %293, %291 : vector<2x32xf32>
    %295 = arith.mulf %286, %266 : vector<2x32xf32>
    %296 = arith.addf %294, %295 : vector<2x32xf32>
    %297 = arith.truncf %296 : vector<2x32xf32> to vector<2x32xbf16>
    %cst_61 = arith.constant dense<0.000000e+00> : vector<2x96xf32>
    %298 = tpu.matmul %297, %2, %cst_61 {dimension_numbers = #tpu.dot_dimension_numbers<[1], [0], [0], [1], [0, 0, 1, 1], [], []>} : vector<2x32xbf16>, vector<32x96xbf16>, vector<2x96xf32> -> vector<2x96xf32>
    %299 = vector.broadcast %4 : vector<1x96xf32> to vector<2x96xf32>
    %300 = arith.addf %298, %299 : vector<2x96xf32>
    %301 = vector.extract_strided_slice %85 {offsets = [0, 0], sizes = [2, 32], strides = [1, 1]} : vector<2x96xf32> to vector<2x32xf32>
    %302 = vector.extract_strided_slice %300 {offsets = [0, 0], sizes = [2, 32], strides = [1, 1]} : vector<2x96xf32> to vector<2x32xf32>
    %303 = arith.addf %301, %302 : vector<2x32xf32>
    %304 = arith.negf %303 : vector<2x32xf32>
    %305 = math.exp %304 : vector<2x32xf32>
    %cst_62 = arith.constant 1.000000e+00 : f32
    %306 = vector.broadcast %cst_62 : f32 to vector<2x32xf32>
    %307 = arith.addf %306, %305 : vector<2x32xf32>
    %308 = arith.divf %306, %307 : vector<2x32xf32>
    %309 = vector.extract_strided_slice %85 {offsets = [0, 32], sizes = [2, 32], strides = [1, 1]} : vector<2x96xf32> to vector<2x32xf32>
    %310 = vector.extract_strided_slice %300 {offsets = [0, 32], sizes = [2, 32], strides = [1, 1]} : vector<2x96xf32> to vector<2x32xf32>
    %311 = arith.addf %309, %310 : vector<2x32xf32>
    %312 = arith.negf %311 : vector<2x32xf32>
    %313 = math.exp %312 : vector<2x32xf32>
    %cst_63 = arith.constant 1.000000e+00 : f32
    %314 = vector.broadcast %cst_63 : f32 to vector<2x32xf32>
    %315 = arith.addf %314, %313 : vector<2x32xf32>
    %316 = arith.divf %314, %315 : vector<2x32xf32>
    %317 = vector.extract_strided_slice %85 {offsets = [0, 64], sizes = [2, 32], strides = [1, 1]} : vector<2x96xf32> to vector<2x32xf32>
    %318 = vector.extract_strided_slice %300 {offsets = [0, 64], sizes = [2, 32], strides = [1, 1]} : vector<2x96xf32> to vector<2x32xf32>
    %319 = arith.mulf %308, %318 : vector<2x32xf32>
    %320 = arith.addf %317, %319 : vector<2x32xf32>
    %321 = math.tanh %320 : vector<2x32xf32>
    %cst_64 = arith.constant 1.000000e+00 : f32
    %322 = vector.broadcast %cst_64 : f32 to vector<2x32xf32>
    %323 = arith.subf %322, %316 : vector<2x32xf32>
    %324 = arith.mulf %323, %321 : vector<2x32xf32>
    %325 = arith.mulf %316, %296 : vector<2x32xf32>
    %326 = arith.addf %324, %325 : vector<2x32xf32>
    %c0_65 = arith.constant 0 : index
    %c0_66 = arith.constant 0 : index
    %327 = vector.load %arg5[%c0_65, %c0_66] : memref<2x16xf32, #tpu.memory_space<vmem>>, vector<2x16xf32>
    %328 = arith.truncf %327 : vector<2x16xf32> to vector<2x16xbf16>
    %c0_67 = arith.constant 0 : index
    %c0_68 = arith.constant 0 : index
    %329 = vector.load %arg6[%c0_67, %c0_68] : memref<16x32xbf16, #tpu.memory_space<vmem>>, vector<16x32xbf16>
    %cst_69 = arith.constant dense<0.000000e+00> : vector<2x32xf32>
    %330 = tpu.matmul %328, %329, %cst_69 {dimension_numbers = #tpu.dot_dimension_numbers<[1], [0], [0], [1], [0, 0, 1, 1], [], []>} : vector<2x16xbf16>, vector<16x32xbf16>, vector<2x32xf32> -> vector<2x32xf32>
    %331 = arith.truncf %326 : vector<2x32xf32> to vector<2x32xbf16>
    %c0_70 = arith.constant 0 : index
    %c0_71 = arith.constant 0 : index
    %332 = vector.load %arg7[%c0_70, %c0_71] : memref<32x32xbf16, #tpu.memory_space<vmem>>, vector<32x32xbf16>
    %cst_72 = arith.constant dense<0.000000e+00> : vector<2x32xf32>
    %333 = tpu.matmul %331, %332, %cst_72 {dimension_numbers = #tpu.dot_dimension_numbers<[1], [0], [0], [1], [0, 0, 1, 1], [], []>} : vector<2x32xbf16>, vector<32x32xbf16>, vector<2x32xf32> -> vector<2x32xf32>
    %334 = arith.addf %330, %333 : vector<2x32xf32>
    %c0_73 = arith.constant 0 : index
    %c0_74 = arith.constant 0 : index
    %335 = vector.load %arg8[%c0_73, %c0_74] : memref<1x32xf32, #tpu.memory_space<vmem>>, vector<1x32xf32>
    %336 = vector.broadcast %335 : vector<1x32xf32> to vector<2x32xf32>
    %337 = arith.addf %334, %336 : vector<2x32xf32>
    %338 = vector.extract_strided_slice %337 {offsets = [0, 0], sizes = [2, 16], strides = [1, 1]} : vector<2x32xf32> to vector<2x16xf32>
    %339 = vector.extract_strided_slice %337 {offsets = [0, 16], sizes = [2, 16], strides = [1, 1]} : vector<2x32xf32> to vector<2x16xf32>
    %c0_75 = arith.constant 0 : index
    %c0_76 = arith.constant 0 : index
    %340 = vector.load %arg11[%c0_75, %c0_76] : memref<2x16xf32, #tpu.memory_space<vmem>>, vector<2x16xf32>
    tpu.vector_store %arg11[%c0_75, %c0_76], %338 {strides = array<i32>} : memref<2x16xf32, #tpu.memory_space<vmem>>, vector<2x16xf32>,
    %c0_77 = arith.constant 0 : index
    %c0_78 = arith.constant 0 : index
    %341 = vector.load %arg12[%c0_77, %c0_78] : memref<2x16xf32, #tpu.memory_space<vmem>>, vector<2x16xf32>
    tpu.vector_store %arg12[%c0_77, %c0_78], %339 {strides = array<i32>} : memref<2x16xf32, #tpu.memory_space<vmem>>, vector<2x16xf32>,
    %cst_79 = arith.constant 5.000000e-01 : f32
    %342 = vector.broadcast %cst_79 : f32 to vector<2x16xf32>
    %343 = arith.mulf %342, %339 : vector<2x16xf32>
    %344 = math.exp %343 : vector<2x16xf32>
    %c0_80 = arith.constant 0 : index
    %c0_81 = arith.constant 0 : index
    %c0_82 = arith.constant 0 : index
    %345 = vector.load %arg9[%c0_80, %c0_81, %c0_82] : memref<1x2x16xf32, #tpu.memory_space<vmem>>, vector<1x2x16xf32>
    %346 = vector.shape_cast %345 : vector<1x2x16xf32> to vector<2x16xf32>
    %347 = arith.mulf %344, %346 : vector<2x16xf32>
    %348 = arith.addf %338, %347 : vector<2x16xf32>
    %c0_83 = arith.constant 0 : index
    %c0_84 = arith.constant 0 : index
    %c0_85 = arith.constant 0 : index
    %349 = vector.load %arg10[%c0_83, %c0_84, %c0_85] : memref<1x2x16xf32, #tpu.memory_space<vmem>>, vector<1x2x16xf32>
    %350 = vector.shape_cast %349 : vector<1x2x16xf32> to vector<2x16xf32>
    %351 = vector.shape_cast %348 : vector<2x16xf32> to vector<1x2x16xf32>
    tpu.vector_store %arg10[%c0_83, %c0_84, %c0_85], %351 {strides = array<i32>} : memref<1x2x16xf32, #tpu.memory_space<vmem>>, vector<1x2x16xf32>,
    return
  }
}

</mosaic_0001>

<llo_original>
// kernel: stochastic_gaussian_actor_forward.1
$region0: #{stochastic_gaussian_actor_forward.1}
  #allocation0 [shape = 'u32[]', space=smem, size = 0x4, offset = 0x4, fixed_abs, tag = 'smem constant byte address 0x4 - core index']
  #allocation1 [shape = 'u32[72,128]{1,0:T(1,128)}', space=vmem, size = 0x9000, scoped, tag = 'internal scratch']
  %s0 = inlined_call_operand.vmem [shape: s32[2,8], index: 0, kind: input, shape index: {}]
  %s1 = inlined_call_operand.hbm [shape: bf16[64,96], index: 1, kind: input, shape index: {}]
  %s2 = inlined_call_operand.hbm [shape: bf16[32,96], index: 2, kind: input, shape index: {}]
  %s3 = inlined_call_operand.hbm [shape: f32[1,96], index: 3, kind: input, shape index: {}]
  %s4 = inlined_call_operand.hbm [shape: f32[1,96], index: 4, kind: input, shape index: {}]
  %s5 = inlined_call_operand.vmem [shape: f32[2,16], index: 5, kind: input, shape index: {}]
  %s6 = inlined_call_operand.vmem [shape: bf16[16,32], index: 6, kind: input, shape index: {}]
  %s7 = inlined_call_operand.hbm [shape: bf16[32,32], index: 7, kind: input, shape index: {}]
  %s8 = inlined_call_operand.hbm [shape: f32[1,32], index: 8, kind: input, shape index: {}]
  %s9 = inlined_call_operand.vmem [shape: f32[1,2,16], index: 9, kind: input, shape index: {}]
  %s10 = inlined_call_operand.hbm [shape: f32[1,2,16], index: 10, kind: output, shape index: {0}]
  %s11 = inlined_call_operand.hbm [shape: f32[2,16], index: 11, kind: output, shape index: {1}]
  %s12 = inlined_call_operand.hbm [shape: f32[2,16], index: 12, kind: output, shape index: {2}]
  %13 = xla_tuple %s10, %s11, %s12
  %s14 = sld [smem:[#allocation0]]
  $region90: #{stochastic_gaussian_actor_forward.1} parent=0
    _
  %s16 = ssub.s32 1, %s14
  %s17 = scalar_select 0, %s16, %s14
  $region1: #{stochastic_gaussian_actor_forward.1} parent=0
    #allocation2 [shape = 'u8[16384]{0}', space=vmem, size = 0x4000, scoped, tag = 'input window, operand 1, single buffered']
    #allocation3 [shape = 's32[1]{0}', space=sflag, size = 0x4, scoped, tag = 'scoped memory for stochastic_gaussian_actor_forward.1']
    #allocation4 [shape = 's32[1]{0}', space=sflag, size = 0x4, scoped, tag = 'scoped memory for stochastic_gaussian_actor_forward.1']
    #allocation5 [shape = 'u8[8192]{0}', space=vmem, size = 0x2000, scoped, tag = 'input window, operand 2, single buffered']
    #allocation6 [shape = 's32[1]{0}', space=sflag, size = 0x4, scoped, tag = 'scoped memory for stochastic_gaussian_actor_forward.1']
    #allocation7 [shape = 'u8[512]{0}', space=vmem, size = 0x400, scoped, tag = 'input window, operand 3, single buffered']
    #allocation8 [shape = 'u8[512]{0}', space=vmem, size = 0x400, scoped, tag = 'input window, operand 4, single buffered']
    #allocation9 [shape = 's32[1]{0}', space=sflag, size = 0x4, scoped, tag = 'scoped memory for stochastic_gaussian_actor_forward.1']
    #allocation10 [shape = 'u8[8192]{0}', space=vmem, size = 0x2000, scoped, tag = 'input window, operand 7, single buffered']
    #allocation11 [shape = 'u8[512]{0}', space=vmem, size = 0x400, scoped, tag = 'input window, operand 8, single buffered']
    #allocation12 [shape = 's32[1]{0}', space=sflag, size = 0x4, scoped, tag = 'scoped memory for stochastic_gaussian_actor_forward.1']
    #allocation13 [shape = 'u8[1024]{0}', space=vmem, size = 0x400, scoped, tag = 'output window, operand 0, single buffered']
    #allocation14 [shape = 'u8[1024]{0}', space=vmem, size = 0x400, scoped, tag = 'output window, operand 1, single buffered']
    #allocation15 [shape = 's32[1]{0}', space=sflag, size = 0x4, scoped, tag = 'scoped memory for stochastic_gaussian_actor_forward.1']
    #allocation16 [shape = 'u8[1024]{0}', space=vmem, size = 0x400, scoped, tag = 'output window, operand 2, single buffered']
    %18 = vsyncpa [#allocation3], 0
    %19 = vsyncpa [#allocation6], 0
    %20 = vsyncpa [#allocation9], 0
    %21 = vsyncpa [#allocation12], 0
    %22 = vsyncpa [#allocation4], 0
    %23 = vsyncpa [#allocation15], 0
    // Predicated region
    $region2: #{stochastic_gaussian_actor_forward.1} parent=1 // pred_check
      _
    $region3: #{stochastic_gaussian_actor_forward.1} parent=1 // pred_check_branch
      %25 = sbr.rel (0) target = $region5
    $region4: #{stochastic_gaussian_actor_forward.1} parent=1 // pred_region
      _
    $region5: #{stochastic_gaussian_actor_forward.1} parent=1 // pred_fallthru
      _
    // Predicated region
    $region6: #{stochastic_gaussian_actor_forward.1} parent=1 // pred_check
      _
    $region7: #{stochastic_gaussian_actor_forward.1} parent=1 // pred_check_branch
      %27 = sbr.rel (0) target = $region9
    $region8: #{stochastic_gaussian_actor_forward.1} parent=1 // pred_region
      %29 = vsyncadd [#allocation3], 0
      %s30 = sshll.u32 %s1, 4
      %s31 = int_to_ptr.hbm [resolvable:$true] %s30
      %s32 = sshll.u32 [#allocation2], 4
      %s33 = int_to_ptr.vmem [resolvable:$true] %s32
      %38 = dma.hbm_to_vmem [thread:$0]  %s31, 512, %s33, [#allocation3], 64, 64, 4
    $region9: #{stochastic_gaussian_actor_forward.1} parent=1 // pred_fallthru
      _
    // Predicated region
    $region10: #{stochastic_gaussian_actor_forward.1} parent=1 // pred_check
      _
    $region11: #{stochastic_gaussian_actor_forward.1} parent=1 // pred_check_branch
      %40 = sbr.rel (0) target = $region13
    $region12: #{stochastic_gaussian_actor_forward.1} parent=1 // pred_region
      %42 = vsyncadd [#allocation6], 0
      %s43 = sshll.u32 %s2, 4
      %s44 = int_to_ptr.hbm [resolvable:$true] %s43
      %s45 = sshll.u32 [#allocation5], 4
      %s46 = int_to_ptr.vmem [resolvable:$true] %s45
      %51 = dma.hbm_to_vmem [thread:$0]  %s44, 256, %s46, [#allocation6], 64, 64, 4
    $region13: #{stochastic_gaussian_actor_forward.1} parent=1 // pred_fallthru
      _
    // Predicated region
    $region14: #{stochastic_gaussian_actor_forward.1} parent=1 // pred_check
      _
    $region15: #{stochastic_gaussian_actor_forward.1} parent=1 // pred_check_branch
      %53 = sbr.rel (0) target = $region17
    $region16: #{stochastic_gaussian_actor_forward.1} parent=1 // pred_region
      %55 = vsyncadd [#allocation6], 0
      %s57 = sshll.u32 %s3, 4
      %s58 = int_to_ptr.hbm [resolvable:$true] %s57
      %s59 = sshll.u32 [#allocation7], 4
      %s60 = int_to_ptr.vmem [resolvable:$true] %s59
      %62 = dma.hbm_to_vmem [thread:$0]  %s58, 16, %s60, [#allocation6]
    $region17: #{stochastic_gaussian_actor_forward.1} parent=1 // pred_fallthru
      _
    // Predicated region
    $region18: #{stochastic_gaussian_actor_forward.1} parent=1 // pred_check
      _
    $region19: #{stochastic_gaussian_actor_forward.1} parent=1 // pred_check_branch
      %64 = sbr.rel (0) target = $region21
    $region20: #{stochastic_gaussian_actor_forward.1} parent=1 // pred_region
      %66 = vsyncadd [#allocation9], 0
      %s68 = sshll.u32 %s4, 4
      %s69 = int_to_ptr.hbm [resolvable:$true] %s68
      %s70 = sshll.u32 [#allocation8], 4
      %s71 = int_to_ptr.vmem [resolvable:$true] %s70
      %73 = dma.hbm_to_vmem [thread:$0]  %s69, 16, %s71, [#allocation9]
    $region21: #{stochastic_gaussian_actor_forward.1} parent=1 // pred_fallthru
      _
    // Predicated region
    $region22: #{stochastic_gaussian_actor_forward.1} parent=1 // pred_check
      _
    $region23: #{stochastic_gaussian_actor_forward.1} parent=1 // pred_check_branch
      %75 = sbr.rel (0) target = $region25
    $region24: #{stochastic_gaussian_actor_forward.1} parent=1 // pred_region
      _
    $region25: #{stochastic_gaussian_actor_forward.1} parent=1 // pred_fallthru
      _
    // Predicated region
    $region26: #{stochastic_gaussian_actor_forward.1} parent=1 // pred_check
      _
    $region27: #{stochastic_gaussian_actor_forward.1} parent=1 // pred_check_branch
      %77 = sbr.rel (0) target = $region29
    $region28: #{stochastic_gaussian_actor_forward.1} parent=1 // pred_region
      _
    $region29: #{stochastic_gaussian_actor_forward.1} parent=1 // pred_fallthru
      _
    // Predicated region
    $region30: #{stochastic_gaussian_actor_forward.1} parent=1 // pred_check
      _
    $region31: #{stochastic_gaussian_actor_forward.1} parent=1 // pred_check_branch
      %79 = sbr.rel (0) target = $region33
    $region32: #{stochastic_gaussian_actor_forward.1} parent=1 // pred_region
      %81 = vsyncadd [#allocation9], 0
      %s82 = sshll.u32 %s7, 4
      %s83 = int_to_ptr.hbm [resolvable:$true] %s82
      %s84 = sshll.u32 [#allocation10], 4
      %s85 = int_to_ptr.vmem [resolvable:$true] %s84
      %90 = dma.hbm_to_vmem [thread:$0]  %s83, 256, %s85, [#allocation9], 64, 64, 4
    $region33: #{stochastic_gaussian_actor_forward.1} parent=1 // pred_fallthru
      _
    // Predicated region
    $region34: #{stochastic_gaussian_actor_forward.1} parent=1 // pred_check
      _
    $region35: #{stochastic_gaussian_actor_forward.1} parent=1 // pred_check_branch
      %92 = sbr.rel (0) target = $region37
    $region36: #{stochastic_gaussian_actor_forward.1} parent=1 // pred_region
      %94 = vsyncadd [#allocation12], 0
      %s96 = sshll.u32 %s8, 4
      %s97 = int_to_ptr.hbm [resolvable:$true] %s96
      %s98 = sshll.u32 [#allocation11], 4
      %s99 = int_to_ptr.vmem [resolvable:$true] %s98
      %101 = dma.hbm_to_vmem [thread:$0]  %s97, 16, %s99, [#allocation12]
    $region37: #{stochastic_gaussian_actor_forward.1} parent=1 // pred_fallthru
      _
    // Predicated region
    $region38: #{stochastic_gaussian_actor_forward.1} parent=1 // pred_check
      _
    $region39: #{stochastic_gaussian_actor_forward.1} parent=1 // pred_check_branch
      %103 = sbr.rel (0) target = $region41
    $region40: #{stochastic_gaussian_actor_forward.1} parent=1 // pred_region
      _
    $region41: #{stochastic_gaussian_actor_forward.1} parent=1 // pred_fallthru
      _
    // Predicated region
    $region42: #{stochastic_gaussian_actor_forward.1} parent=1 // pred_check
      _
    $region43: #{stochastic_gaussian_actor_forward.1} parent=1 // pred_check_branch
      %105 = sbr.rel (0) target = $region45
    $region44: #{stochastic_gaussian_actor_forward.1} parent=1 // pred_region
      %107 = dma.done [#allocation3], 512
    $region45: #{stochastic_gaussian_actor_forward.1} parent=1 // pred_fallthru
      _
    // Predicated region
    $region46: #{stochastic_gaussian_actor_forward.1} parent=1 // pred_check
      _
    $region47: #{stochastic_gaussian_actor_forward.1} parent=1 // pred_check_branch
      %109 = sbr.rel (0) target = $region49
    $region48: #{stochastic_gaussian_actor_forward.1} parent=1 // pred_region
      %111 = dma.done [#allocation6], 256
    $region49: #{stochastic_gaussian_actor_forward.1} parent=1 // pred_fallthru
      _
    // Predicated region
    $region50: #{stochastic_gaussian_actor_forward.1} parent=1 // pred_check
      _
    $region51: #{stochastic_gaussian_actor_forward.1} parent=1 // pred_check_branch
      %113 = sbr.rel (0) target = $region53
    $region52: #{stochastic_gaussian_actor_forward.1} parent=1 // pred_region
      %115 = dma.done [#allocation6], 16
    $region53: #{stochastic_gaussian_actor_forward.1} parent=1 // pred_fallthru
      _
    // Predicated region
    $region54: #{stochastic_gaussian_actor_forward.1} parent=1 // pred_check
      _
    $region55: #{stochastic_gaussian_actor_forward.1} parent=1 // pred_check_branch
      %117 = sbr.rel (0) target = $region57
    $region56: #{stochastic_gaussian_actor_forward.1} parent=1 // pred_region
      %119 = dma.done [#allocation9], 16
    $region57: #{stochastic_gaussian_actor_forward.1} parent=1 // pred_fallthru
      _
    // Predicated region
    $region58: #{stochastic_gaussian_actor_forward.1} parent=1 // pred_check
      _
    $region59: #{stochastic_gaussian_actor_forward.1} parent=1 // pred_check_branch
      %121 = sbr.rel (0) target = $region61
    $region60: #{stochastic_gaussian_actor_forward.1} parent=1 // pred_region
      %123 = dma.done [#allocation9], 256
    $region61: #{stochastic_gaussian_actor_forward.1} parent=1 // pred_fallthru
      _
    // Predicated region
    $region62: #{stochastic_gaussian_actor_forward.1} parent=1 // pred_check
      _
    $region63: #{stochastic_gaussian_actor_forward.1} parent=1 // pred_check_branch
      %125 = sbr.rel (0) target = $region65
    $region64: #{stochastic_gaussian_actor_forward.1} parent=1 // pred_region
      %127 = dma.done [#allocation12], 16
    $region65: #{stochastic_gaussian_actor_forward.1} parent=1 // pred_fallthru
      _
    %v129 = vld [vmem:[%s0] sm:$0x3]
    %v130 = vld [vmem:[#allocation2] sm:$0xf]
    %v131 = vld [vmem:[#allocation2 + $0x4] sm:$0xf]
    %v132 = vld [vmem:[#allocation2 + $0x8] sm:$0xf]
    %v133 = vld [vmem:[#allocation2 + $0xc] sm:$0xf]
    %v134 = vld [vmem:[#allocation2 + $0x10] sm:$0xf]
    %v135 = vld [vmem:[#allocation2 + $0x14] sm:$0xf]
    %v136 = vld [vmem:[#allocation2 + $0x18] sm:$0xf]
    %v137 = vld [vmem:[#allocation2 + $0x1c] sm:$0xf]
    %v138 = vld [vmem:[#allocation5] sm:$0xf]
    %v139 = vld [vmem:[#allocation5 + $0x4] sm:$0xf]
    %v140 = vld [vmem:[#allocation5 + $0x8] sm:$0xf]
    %v141 = vld [vmem:[#allocation5 + $0xc] sm:$0xf]
    %v142 = vld [vmem:[#allocation7] sm:$0x1]
    %v143 = vld [vmem:[#allocation8] sm:$0x1]
    %v144 = vlaneseq
    %v145 = vand.u32 %v144, 127
    %146 = vset.pattern.permute.xlu0 0
    %147 = vperm.xlu0 %146, %v129
    %v148 = vpop.permute.xlu0 %147
    %vm149 = vcmp.eq.s32.totalorder %v145, %v148
    %v150 = vsel %vm149, 1.0, 0.0
    %v151 = vpack.c.bf16 %v150, %v150
    %v153 = vperm.slane %v142, 0
    %v163 = vunpack.c.l.b16 %v130
    %v164 = vunpack.c.l.b16 %v131
    %v165 = vunpack.c.l.b16 %v132
    %v166 = vunpack.c.l.b16 %v133
    %v167 = vunpack.c.l.b16 %v134
    %v168 = vunpack.c.l.b16 %v135
    %v169 = vunpack.c.l.b16 %v136
    %v170 = vunpack.c.l.b16 %v137
    %v171 = vpack.c.b16 %v164, %v163
    %v172 = vpack.c.b16 %v166, %v165
    %v173 = vpack.c.b16 %v168, %v167
    %v174 = vpack.c.b16 %v170, %v169
    %vm179 = vcmask 523264
    %v181 = vsel %vm179, %v151, 0
    %183 = vmatpush.bf16.msra.mxu0 0
    %184 = vmatpush.bf16.msra.mxu0 0
    %185 = vmatpush.bf16.msra.mxu0 0
    %186 = vmatpush.bf16.msra.mxu0 0
    %187 = vmatpush.bf16.msra.mxu0 %v174
    %188 = vmatpush.bf16.msra.mxu0 %v173
    %189 = vmatpush.bf16.msra.mxu0 %v172
    %190 = vmatpush.bf16.msra.mxu0 %v171
    %191 = vmatmul.bf16.gmra.mxu0 %v181
    %v192 = vpop.f32.mrf.mxu0
    %v193 = vadd.f32 %v153, %v192
    %v194 = vpop.f32.mrf.mxu0
    %195 = vdwg.mxu0
    %196 = vset.pattern.permute.xlu0 1
    %197 = vperm.xlu0 %196, %v129
    %v198 = vpop.permute.xlu0 %197
    %vm199 = vcmp.eq.s32.totalorder %v145, %v198
    %v200 = vsel %vm199, 1.0, 0.0
    %v201 = vpack.c.bf16 %v200, %v200
    %v203 = vsel %vm179, %v201, 0
    %205 = vmatpush.bf16.msra.mxu0 0
    %206 = vmatpush.bf16.msra.mxu0 0
    %207 = vmatpush.bf16.msra.mxu0 0
    %208 = vmatpush.bf16.msra.mxu0 0
    %209 = vmatpush.bf16.msra.mxu0 %v174
    %210 = vmatpush.bf16.msra.mxu0 %v173
    %211 = vmatpush.bf16.msra.mxu0 %v172
    %212 = vmatpush.bf16.msra.mxu0 %v171
    %213 = vmatmul.bf16.gmra.mxu0 %v203
    %v214 = vpop.f32.mrf.mxu0
    %v215 = vadd.f32 %v153, %v214
    %v216 = vpop.f32.mrf.mxu0
    %217 = vdwg.mxu0
    %218 = vset.pattern.permute.xlu0 2
    %219 = vperm.xlu0 %218, %v129
    %v220 = vpop.permute.xlu0 %219
    %vm221 = vcmp.eq.s32.totalorder %v145, %v220
    %v222 = vsel %vm221, 1.0, 0.0
    %v223 = vpack.c.bf16 %v222, %v222
    %v225 = vsel %vm179, %v223, 0
    %227 = vmatpush.bf16.msra.mxu0 0
    %228 = vmatpush.bf16.msra.mxu0 0
    %229 = vmatpush.bf16.msra.mxu0 0
    %230 = vmatpush.bf16.msra.mxu0 0
    %231 = vmatpush.bf16.msra.mxu0 %v174
    %232 = vmatpush.bf16.msra.mxu0 %v173
    %233 = vmatpush.bf16.msra.mxu0 %v172
    %234 = vmatpush.bf16.msra.mxu0 %v171
    %235 = vmatmul.bf16.gmra.mxu0 %v225
    %v236 = vpop.f32.mrf.mxu0
    %v237 = vadd.f32 %v153, %v236
    %v238 = vpop.f32.mrf.mxu0
    %239 = vdwg.mxu0
    %240 = vset.pattern.permute.xlu0 3
    %241 = vperm.xlu0 %240, %v129
    %v242 = vpop.permute.xlu0 %241
    %vm243 = vcmp.eq.s32.totalorder %v145, %v242
    %v244 = vsel %vm243, 1.0, 0.0
    %v245 = vpack.c.bf16 %v244, %v244
    %v247 = vsel %vm179, %v245, 0
    %249 = vmatpush.bf16.msra.mxu0 0
    %250 = vmatpush.bf16.msra.mxu0 0
    %251 = vmatpush.bf16.msra.mxu0 0
    %252 = vmatpush.bf16.msra.mxu0 0
    %253 = vmatpush.bf16.msra.mxu0 %v174
    %254 = vmatpush.bf16.msra.mxu0 %v173
    %255 = vmatpush.bf16.msra.mxu0 %v172
    %256 = vmatpush.bf16.msra.mxu0 %v171
    %257 = vmatmul.bf16.gmra.mxu0 %v247
    %v258 = vpop.f32.mrf.mxu0
    %v259 = vadd.f32 %v153, %v258
    %v260 = vpop.f32.mrf.mxu0
    %261 = vdwg.mxu0
    %262 = vset.pattern.permute.xlu0 4
    %263 = vperm.xlu0 %262, %v129
    %v264 = vpop.permute.xlu0 %263
    %vm265 = vcmp.eq.s32.totalorder %v145, %v264
    %v266 = vsel %vm265, 1.0, 0.0
    %v267 = vpack.c.bf16 %v266, %v266
    %v269 = vsel %vm179, %v267, 0
    %271 = vmatpush.bf16.msra.mxu0 0
    %272 = vmatpush.bf16.msra.mxu0 0
    %273 = vmatpush.bf16.msra.mxu0 0
    %274 = vmatpush.bf16.msra.mxu0 0
    %275 = vmatpush.bf16.msra.mxu0 %v174
    %276 = vmatpush.bf16.msra.mxu0 %v173
    %277 = vmatpush.bf16.msra.mxu0 %v172
    %278 = vmatpush.bf16.msra.mxu0 %v171
    %279 = vmatmul.bf16.gmra.mxu0 %v269
    %v280 = vpop.f32.mrf.mxu0
    %v281 = vadd.f32 %v153, %v280
    %v282 = vpop.f32.mrf.mxu0
    %283 = vdwg.mxu0
    %284 = vset.pattern.permute.xlu0 5
    %285 = vperm.xlu0 %284, %v129
    %v286 = vpop.permute.xlu0 %285
    %vm287 = vcmp.eq.s32.totalorder %v145, %v286
    %v288 = vsel %vm287, 1.0, 0.0
    %v289 = vpack.c.bf16 %v288, %v288
    %v291 = vsel %vm179, %v289, 0
    %293 = vmatpush.bf16.msra.mxu0 0
    %294 = vmatpush.bf16.msra.mxu0 0
    %295 = vmatpush.bf16.msra.mxu0 0
    %296 = vmatpush.bf16.msra.mxu0 0
    %297 = vmatpush.bf16.msra.mxu0 %v174
    %298 = vmatpush.bf16.msra.mxu0 %v173
    %299 = vmatpush.bf16.msra.mxu0 %v172
    %300 = vmatpush.bf16.msra.mxu0 %v171
    %301 = vmatmul.bf16.gmra.mxu0 %v291
    %v302 = vpop.f32.mrf.mxu0
    %v303 = vadd.f32 %v153, %v302
    %v304 = vpop.f32.mrf.mxu0
    %305 = vdwg.mxu0
    %306 = vset.pattern.permute.xlu0 6
    %307 = vperm.xlu0 %306, %v129
    %v308 = vpop.permute.xlu0 %307
    %vm309 = vcmp.eq.s32.totalorder %v145, %v308
    %v310 = vsel %vm309, 1.0, 0.0
    %v311 = vpack.c.bf16 %v310, %v310
    %v313 = vsel %vm179, %v311, 0
    %315 = vmatpush.bf16.msra.mxu0 0
    %316 = vmatpush.bf16.msra.mxu0 0
    %317 = vmatpush.bf16.msra.mxu0 0
    %318 = vmatpush.bf16.msra.mxu0 0
    %319 = vmatpush.bf16.msra.mxu0 %v174
    %320 = vmatpush.bf16.msra.mxu0 %v173
    %321 = vmatpush.bf16.msra.mxu0 %v172
    %322 = vmatpush.bf16.msra.mxu0 %v171
    %323 = vmatmul.bf16.gmra.mxu0 %v313
    %v324 = vpop.f32.mrf.mxu0
    %v325 = vadd.f32 %v153, %v324
    %v326 = vpop.f32.mrf.mxu0
    %327 = vdwg.mxu0
    %328 = vset.pattern.permute.xlu0 7
    %329 = vperm.xlu0 %328, %v129
    %v330 = vpop.permute.xlu0 %329
    %vm331 = vcmp.eq.s32.totalorder %v145, %v330
    %v332 = vsel %vm331, 1.0, 0.0
    %v333 = vpack.c.bf16 %v332, %v332
    %v335 = vsel %vm179, %v333, 0
    %337 = vmatpush.bf16.msra.mxu0 0
    %338 = vmatpush.bf16.msra.mxu0 0
    %339 = vmatpush.bf16.msra.mxu0 0
    %340 = vmatpush.bf16.msra.mxu0 0
    %341 = vmatpush.bf16.msra.mxu0 %v174
    %342 = vmatpush.bf16.msra.mxu0 %v173
    %343 = vmatpush.bf16.msra.mxu0 %v172
    %344 = vmatpush.bf16.msra.mxu0 %v171
    %345 = vmatmul.bf16.gmra.mxu0 %v335
    %v346 = vpop.f32.mrf.mxu0
    %v347 = vadd.f32 %v153, %v346
    %v348 = vpop.f32.mrf.mxu0
    %349 = vdwg.mxu0
    %v351 = vperm.slane %v143, 0
    %v357 = vunpack.c.l.b16 %v138
    %v358 = vunpack.c.l.b16 %v139
    %v359 = vunpack.c.l.b16 %v140
    %v360 = vunpack.c.l.b16 %v141
    %v361 = vpack.c.b16 %v358, %v357
    %v362 = vpack.c.b16 %v360, %v359
    %vm365 = vcmask 261120
    %v367 = vsel %vm365, 0, 0
    %369 = vmatpush.bf16.msra.mxu0 0
    %370 = vmatpush.bf16.msra.mxu0 0
    %371 = vmatpush.bf16.msra.mxu0 0
    %372 = vmatpush.bf16.msra.mxu0 0
    %373 = vmatpush.bf16.msra.mxu0 0
    %374 = vmatpush.bf16.msra.mxu0 0
    %375 = vmatpush.bf16.msra.mxu0 %v362
    %376 = vmatpush.bf16.msra.mxu0 %v361
    %377 = vmatmul.bf16.gmra.mxu0 %v367
    %v378 = vpop.f32.mrf.mxu0
    %v379 = vadd.f32 %v351, %v378
    %v380 = vpop.f32.mrf.mxu0
    %381 = vdwg.mxu0
    %v382 = vadd.f32 %v193, %v379
    %v383 = vxor.u32 %v382, 2147483648
    %v384 = vmul.f32 %v383, 1.442695
    %v385 = vpow.pop %v384
    %v386 = vadd.f32 %v385, 1.0
    %v387 = vrcp.pop %v386
    %v388 = vmul.f32 %v386, %v387
    %v389 = vsub.f32 1.0, %v388
    %v390 = vmul.f32 %v387, %v389
    %v391 = vadd.f32 %v387, %v390
    %vm392 = vweird.f32 %v386
    %vm393 = vweird.f32 %v387
    %vm394 = vmor %vm392, %vm393
    %v395 = vsel %vm394, %v387, %v391
    %v396 = vand.u32 2147483647, %v386
    %vm397 = vcmp.eq.f32.partialorder %v396, 8.507059e+37
    %v398 = vand.u32 %v386, 2147483648
    %v399 = vor.u32 1.1754944e-38, %v398
    %v400 = vsel %vm397, %v399, %v395
    %v401 = vmul.f32 1.0, %v400
    %403 = vrot.lane.b32.xlu0 %v379, 64
    %v404 = vpop.permute.xlu0 %403
    %v406 = vmul.f32 %v401, %v404
    %408 = vrot.lane.b32.xlu0 %v406, 64
    %v409 = vpop.permute.xlu0 %408
    %v411 = vadd.f32 %v193, %v409
    %v412 = vtanh.pop %v411
    %v413 = vsub.f32 1.0, %v401
    %415 = vrot.lane.b32.xlu0 %v412, 96
    %v416 = vpop.permute.xlu0 %415
    %v418 = vmul.f32 %v413, %v416
    %v419 = vmul.f32 %v401, 0.0
    %v420 = vadd.f32 %v418, %v419
    %v421 = vpack.c.bf16 %v420, %v420
    %423 = vrot.lane.b32.xlu0 %v421, 96
    %v424 = vpop.permute.xlu0 %423
    %v426 = vsel %vm365, %v424, 0
    %428 = vmatpush.bf16.msra.mxu0 0
    %429 = vmatpush.bf16.msra.mxu0 0
    %430 = vmatpush.bf16.msra.mxu0 0
    %431 = vmatpush.bf16.msra.mxu0 0
    %432 = vmatpush.bf16.msra.mxu0 0
    %433 = vmatpush.bf16.msra.mxu0 0
    %434 = vmatpush.bf16.msra.mxu0 %v362
    %435 = vmatpush.bf16.msra.mxu0 %v361
    %436 = vmatmul.bf16.gmra.mxu0 %v426
    %v437 = vpop.f32.mrf.mxu0
    %v438 = vadd.f32 %v351, %v437
    %v439 = vpop.f32.mrf.mxu0
    %440 = vdwg.mxu0
    %v441 = vadd.f32 %v215, %v438
    %v442 = vxor.u32 %v441, 2147483648
    %v443 = vmul.f32 %v442, 1.442695
    %v444 = vpow.pop %v443
    %v445 = vadd.f32 %v444, 1.0
    %v446 = vrcp.pop %v445
    %v447 = vmul.f32 %v445, %v446
    %v448 = vsub.f32 1.0, %v447
    %v449 = vmul.f32 %v446, %v448
    %v450 = vadd.f32 %v446, %v449
    %vm451 = vweird.f32 %v445
    %vm452 = vweird.f32 %v446
    %vm453 = vmor %vm451, %vm452
    %v454 = vsel %vm453, %v446, %v450
    %v455 = vand.u32 2147483647, %v445
    %vm456 = vcmp.eq.f32.partialorder %v455, 8.507059e+37
    %v457 = vand.u32 %v445, 2147483648
    %v458 = vor.u32 1.1754944e-38, %v457
    %v459 = vsel %vm456, %v458, %v454
    %v460 = vmul.f32 1.0, %v459
    %462 = vrot.lane.b32.xlu0 %v438, 64
    %v463 = vpop.permute.xlu0 %462
    %v465 = vmul.f32 %v460, %v463
    %467 = vrot.lane.b32.xlu0 %v465, 64
    %v468 = vpop.permute.xlu0 %467
    %v470 = vadd.f32 %v215, %v468
    %v471 = vtanh.pop %v470
    %v472 = vsub.f32 1.0, %v460
    %474 = vrot.lane.b32.xlu0 %v471, 96
    %v475 = vpop.permute.xlu0 %474
    %v477 = vmul.f32 %v472, %v475
    %v478 = vmul.f32 %v460, %v420
    %v479 = vadd.f32 %v477, %v478
    %v480 = vpack.c.bf16 %v479, %v479
    %482 = vrot.lane.b32.xlu0 %v480, 96
    %v483 = vpop.permute.xlu0 %482
    %v485 = vsel %vm365, %v483, 0
    %487 = vmatpush.bf16.msra.mxu0 0
    %488 = vmatpush.bf16.msra.mxu0 0
    %489 = vmatpush.bf16.msra.mxu0 0
    %490 = vmatpush.bf16.msra.mxu0 0
    %491 = vmatpush.bf16.msra.mxu0 0
    %492 = vmatpush.bf16.msra.mxu0 0
    %493 = vmatpush.bf16.msra.mxu0 %v362
    %494 = vmatpush.bf16.msra.mxu0 %v361
    %495 = vmatmul.bf16.gmra.mxu0 %v485
    %v496 = vpop.f32.mrf.mxu0
    %v497 = vadd.f32 %v351, %v496
    %v498 = vpop.f32.mrf.mxu0
    %499 = vdwg.mxu0
    %v500 = vadd.f32 %v237, %v497
    %v501 = vxor.u32 %v500, 2147483648
    %v502 = vmul.f32 %v501, 1.442695
    %v503 = vpow.pop %v502
    %v504 = vadd.f32 %v503, 1.0
    %v505 = vrcp.pop %v504
    %v506 = vmul.f32 %v504, %v505
    %v507 = vsub.f32 1.0, %v506
    %v508 = vmul.f32 %v505, %v507
    %v509 = vadd.f32 %v505, %v508
    %vm510 = vweird.f32 %v504
    %vm511 = vweird.f32 %v505
    %vm512 = vmor %vm510, %vm511
    %v513 = vsel %vm512, %v505, %v509
    %v514 = vand.u32 2147483647, %v504
    %vm515 = vcmp.eq.f32.partialorder %v514, 8.507059e+37
    %v516 = vand.u32 %v504, 2147483648
    %v517 = vor.u32 1.1754944e-38, %v516
    %v518 = vsel %vm515, %v517, %v513
    %v519 = vmul.f32 1.0, %v518
    %521 = vrot.lane.b32.xlu0 %v497, 64
    %v522 = vpop.permute.xlu0 %521
    %v524 = vmul.f32 %v519, %v522
    %526 = vrot.lane.b32.xlu0 %v524, 64
    %v527 = vpop.permute.xlu0 %526
    %v529 = vadd.f32 %v237, %v527
    %v530 = vtanh.pop %v529
    %v531 = vsub.f32 1.0, %v519
    %533 = vrot.lane.b32.xlu0 %v530, 96
    %v534 = vpop.permute.xlu0 %533
    %v536 = vmul.f32 %v531, %v534
    %v537 = vmul.f32 %v519, %v479
    %v538 = vadd.f32 %v536, %v537
    %v539 = vpack.c.bf16 %v538, %v538
    %541 = vrot.lane.b32.xlu0 %v539, 96
    %v542 = vpop.permute.xlu0 %541
    %v544 = vsel %vm365, %v542, 0
    %546 = vmatpush.bf16.msra.mxu0 0
    %547 = vmatpush.bf16.msra.mxu0 0
    %548 = vmatpush.bf16.msra.mxu0 0
    %549 = vmatpush.bf16.msra.mxu0 0
    %550 = vmatpush.bf16.msra.mxu0 0
    %551 = vmatpush.bf16.msra.mxu0 0
    %552 = vmatpush.bf16.msra.mxu0 %v362
    %553 = vmatpush.bf16.msra.mxu0 %v361
    %554 = vmatmul.bf16.gmra.mxu0 %v544
    %v555 = vpop.f32.mrf.mxu0
    %v556 = vadd.f32 %v351, %v555
    %v557 = vpop.f32.mrf.mxu0
    %558 = vdwg.mxu0
    %v559 = vadd.f32 %v259, %v556
    %v560 = vxor.u32 %v559, 2147483648
    %v561 = vmul.f32 %v560, 1.442695
    %v562 = vpow.pop %v561
    %v563 = vadd.f32 %v562, 1.0
    %v564 = vrcp.pop %v563
    %v565 = vmul.f32 %v563, %v564
    %v566 = vsub.f32 1.0, %v565
    %v567 = vmul.f32 %v564, %v566
    %v568 = vadd.f32 %v564, %v567
    %vm569 = vweird.f32 %v563
    %vm570 = vweird.f32 %v564
    %vm571 = vmor %vm569, %vm570
    %v572 = vsel %vm571, %v564, %v568
    %v573 = vand.u32 2147483647, %v563
    %vm574 = vcmp.eq.f32.partialorder %v573, 8.507059e+37
    %v575 = vand.u32 %v563, 2147483648
    %v576 = vor.u32 1.1754944e-38, %v575
    %v577 = vsel %vm574, %v576, %v572
    %v578 = vmul.f32 1.0, %v577
    %580 = vrot.lane.b32.xlu0 %v556, 64
    %v581 = vpop.permute.xlu0 %580
    %v583 = vmul.f32 %v578, %v581
    %585 = vrot.lane.b32.xlu0 %v583, 64
    %v586 = vpop.permute.xlu0 %585
    %v588 = vadd.f32 %v259, %v586
    %v589 = vtanh.pop %v588
    %v590 = vsub.f32 1.0, %v578
    %592 = vrot.lane.b32.xlu0 %v589, 96
    %v593 = vpop.permute.xlu0 %592
    %v595 = vmul.f32 %v590, %v593
    %v596 = vmul.f32 %v578, %v538
    %v597 = vadd.f32 %v595, %v596
    %v598 = vpack.c.bf16 %v597, %v597
    %600 = vrot.lane.b32.xlu0 %v598, 96
    %v601 = vpop.permute.xlu0 %600
    %v603 = vsel %vm365, %v601, 0
    %605 = vmatpush.bf16.msra.mxu0 0
    %606 = vmatpush.bf16.msra.mxu0 0
    %607 = vmatpush.bf16.msra.mxu0 0
    %608 = vmatpush.bf16.msra.mxu0 0
    %609 = vmatpush.bf16.msra.mxu0 0
    %610 = vmatpush.bf16.msra.mxu0 0
    %611 = vmatpush.bf16.msra.mxu0 %v362
    %612 = vmatpush.bf16.msra.mxu0 %v361
    %613 = vmatmul.bf16.gmra.mxu0 %v603
    %v614 = vpop.f32.mrf.mxu0
    %v615 = vadd.f32 %v351, %v614
    %v616 = vpop.f32.mrf.mxu0
    %617 = vdwg.mxu0
    %v618 = vadd.f32 %v281, %v615
    %v619 = vxor.u32 %v618, 2147483648
    %v620 = vmul.f32 %v619, 1.442695
    %v621 = vpow.pop %v620
    %v622 = vadd.f32 %v621, 1.0
    %v623 = vrcp.pop %v622
    %v624 = vmul.f32 %v622, %v623
    %v625 = vsub.f32 1.0, %v624
    %v626 = vmul.f32 %v623, %v625
    %v627 = vadd.f32 %v623, %v626
    %vm628 = vweird.f32 %v622
    %vm629 = vweird.f32 %v623
    %vm630 = vmor %vm628, %vm629
    %v631 = vsel %vm630, %v623, %v627
    %v632 = vand.u32 2147483647, %v622
    %vm633 = vcmp.eq.f32.partialorder %v632, 8.507059e+37
    %v634 = vand.u32 %v622, 2147483648
    %v635 = vor.u32 1.1754944e-38, %v634
    %v636 = vsel %vm633, %v635, %v631
    %v637 = vmul.f32 1.0, %v636
    %639 = vrot.lane.b32.xlu0 %v615, 64
    %v640 = vpop.permute.xlu0 %639
    %v642 = vmul.f32 %v637, %v640
    %644 = vrot.lane.b32.xlu0 %v642, 64
    %v645 = vpop.permute.xlu0 %644
    %v647 = vadd.f32 %v281, %v645
    %v648 = vtanh.pop %v647
    %v649 = vsub.f32 1.0, %v637
    %651 = vrot.lane.b32.xlu0 %v648, 96
    %v652 = vpop.permute.xlu0 %651
    %v654 = vmul.f32 %v649, %v652
    %v655 = vmul.f32 %v637, %v597
    %v656 = vadd.f32 %v654, %v655
    %v657 = vpack.c.bf16 %v656, %v656
    %659 = vrot.lane.b32.xlu0 %v657, 96
    %v660 = vpop.permute.xlu0 %659
    %v662 = vsel %vm365, %v660, 0
    %664 = vmatpush.bf16.msra.mxu0 0
    %665 = vmatpush.bf16.msra.mxu0 0
    %666 = vmatpush.bf16.msra.mxu0 0
    %667 = vmatpush.bf16.msra.mxu0 0
    %668 = vmatpush.bf16.msra.mxu0 0
    %669 = vmatpush.bf16.msra.mxu0 0
    %670 = vmatpush.bf16.msra.mxu0 %v362
    %671 = vmatpush.bf16.msra.mxu0 %v361
    %672 = vmatmul.bf16.gmra.mxu0 %v662
    %v673 = vpop.f32.mrf.mxu0
    %v674 = vadd.f32 %v351, %v673
    %v675 = vpop.f32.mrf.mxu0
    %676 = vdwg.mxu0
    %v677 = vadd.f32 %v303, %v674
    %v678 = vxor.u32 %v677, 2147483648
    %v679 = vmul.f32 %v678, 1.442695
    %v680 = vpow.pop %v679
    %v681 = vadd.f32 %v680, 1.0
    %v682 = vrcp.pop %v681
    %v683 = vmul.f32 %v681, %v682
    %v684 = vsub.f32 1.0, %v683
    %v685 = vmul.f32 %v682, %v684
    %v686 = vadd.f32 %v682, %v685
    %vm687 = vweird.f32 %v681
    %vm688 = vweird.f32 %v682
    %vm689 = vmor %vm687, %vm688
    %v690 = vsel %vm689, %v682, %v686
    %v691 = vand.u32 2147483647, %v681
    %vm692 = vcmp.eq.f32.partialorder %v691, 8.507059e+37
    %v693 = vand.u32 %v681, 2147483648
    %v694 = vor.u32 1.1754944e-38, %v693
    %v695 = vsel %vm692, %v694, %v690
    %v696 = vmul.f32 1.0, %v695
    %698 = vrot.lane.b32.xlu0 %v674, 64
    %v699 = vpop.permute.xlu0 %698
    %v701 = vmul.f32 %v696, %v699
    %703 = vrot.lane.b32.xlu0 %v701, 64
    %v704 = vpop.permute.xlu0 %703
    %v706 = vadd.f32 %v303, %v704
    %v707 = vtanh.pop %v706
    %v708 = vsub.f32 1.0, %v696
    %710 = vrot.lane.b32.xlu0 %v707, 96
    %v711 = vpop.permute.xlu0 %710
    %v713 = vmul.f32 %v708, %v711
    %v714 = vmul.f32 %v696, %v656
    %v715 = vadd.f32 %v713, %v714
    %v716 = vpack.c.bf16 %v715, %v715
    %718 = vrot.lane.b32.xlu0 %v716, 96
    %v719 = vpop.permute.xlu0 %718
    %v721 = vsel %vm365, %v719, 0
    %723 = vmatpush.bf16.msra.mxu0 0
    %724 = vmatpush.bf16.msra.mxu0 0
    %725 = vmatpush.bf16.msra.mxu0 0
    %726 = vmatpush.bf16.msra.mxu0 0
    %727 = vmatpush.bf16.msra.mxu0 0
    %728 = vmatpush.bf16.msra.mxu0 0
    %729 = vmatpush.bf16.msra.mxu0 %v362
    %730 = vmatpush.bf16.msra.mxu0 %v361
    %731 = vmatmul.bf16.gmra.mxu0 %v721
    %v732 = vpop.f32.mrf.mxu0
    %v733 = vadd.f32 %v351, %v732
    %v734 = vpop.f32.mrf.mxu0
    %735 = vdwg.mxu0
    %v736 = vadd.f32 %v325, %v733
    %v737 = vxor.u32 %v736, 2147483648
    %v738 = vmul.f32 %v737, 1.442695
    %v739 = vpow.pop %v738
    %v740 = vadd.f32 %v739, 1.0
    %v741 = vrcp.pop %v740
    %v742 = vmul.f32 %v740, %v741
    %v743 = vsub.f32 1.0, %v742
    %v744 = vmul.f32 %v741, %v743
    %v745 = vadd.f32 %v741, %v744
    %vm746 = vweird.f32 %v740
    %vm747 = vweird.f32 %v741
    %vm748 = vmor %vm746, %vm747
    %v749 = vsel %vm748, %v741, %v745
    %v750 = vand.u32 2147483647, %v740
    %vm751 = vcmp.eq.f32.partialorder %v750, 8.507059e+37
    %v752 = vand.u32 %v740, 2147483648
    %v753 = vor.u32 1.1754944e-38, %v752
    %v754 = vsel %vm751, %v753, %v749
    %v755 = vmul.f32 1.0, %v754
    %757 = vrot.lane.b32.xlu0 %v733, 64
    %v758 = vpop.permute.xlu0 %757
    %v760 = vmul.f32 %v755, %v758
    %762 = vrot.lane.b32.xlu0 %v760, 64
    %v763 = vpop.permute.xlu0 %762
    %v765 = vadd.f32 %v325, %v763
    %v766 = vtanh.pop %v765
    %v767 = vsub.f32 1.0, %v755
    %769 = vrot.lane.b32.xlu0 %v766, 96
    %v770 = vpop.permute.xlu0 %769
    %v772 = vmul.f32 %v767, %v770
    %v773 = vmul.f32 %v755, %v715
    %v774 = vadd.f32 %v772, %v773
    %v775 = vpack.c.bf16 %v774, %v774
    %777 = vrot.lane.b32.xlu0 %v775, 96
    %v778 = vpop.permute.xlu0 %777
    %v780 = vsel %vm365, %v778, 0
    %782 = vmatpush.bf16.msra.mxu0 0
    %783 = vmatpush.bf16.msra.mxu0 0
    %784 = vmatpush.bf16.msra.mxu0 0
    %785 = vmatpush.bf16.msra.mxu0 0
    %786 = vmatpush.bf16.msra.mxu0 0
    %787 = vmatpush.bf16.msra.mxu0 0
    %788 = vmatpush.bf16.msra.mxu0 %v362
    %789 = vmatpush.bf16.msra.mxu0 %v361
    %790 = vmatmul.bf16.gmra.mxu0 %v780
    %v791 = vpop.f32.mrf.mxu0
    %v792 = vadd.f32 %v351, %v791
    %v793 = vpop.f32.mrf.mxu0
    %794 = vdwg.mxu0
    %v795 = vadd.f32 %v347, %v792
    %v796 = vxor.u32 %v795, 2147483648
    %v797 = vmul.f32 %v796, 1.442695
    %v798 = vpow.pop %v797
    %v799 = vadd.f32 %v798, 1.0
    %v800 = vrcp.pop %v799
    %v801 = vmul.f32 %v799, %v800
    %v802 = vsub.f32 1.0, %v801
    %v803 = vmul.f32 %v800, %v802
    %v804 = vadd.f32 %v800, %v803
    %vm805 = vweird.f32 %v799
    %vm806 = vweird.f32 %v800
    %vm807 = vmor %vm805, %vm806
    %v808 = vsel %vm807, %v800, %v804
    %v809 = vand.u32 2147483647, %v799
    %vm810 = vcmp.eq.f32.partialorder %v809, 8.507059e+37
    %v811 = vand.u32 %v799, 2147483648
    %v812 = vor.u32 1.1754944e-38, %v811
    %v813 = vsel %vm810, %v812, %v808
    %v814 = vmul.f32 1.0, %v813
    %816 = vrot.lane.b32.xlu0 %v792, 64
    %v817 = vpop.permute.xlu0 %816
    %v819 = vmul.f32 %v814, %v817
    %821 = vrot.lane.b32.xlu0 %v819, 64
    %v822 = vpop.permute.xlu0 %821
    %v824 = vadd.f32 %v347, %v822
    %v825 = vtanh.pop %v824
    %v826 = vsub.f32 1.0, %v814
    %828 = vrot.lane.b32.xlu0 %v825, 96
    %v829 = vpop.permute.xlu0 %828
    %v831 = vmul.f32 %v826, %v829
    %v832 = vmul.f32 %v814, %v774
    %v833 = vadd.f32 %v831, %v832
    %v834 = vld [vmem:[%s5] sm:$0x3]
    %v835 = vpack.c.bf16 %v834, %v834
    %v836 = vld [vmem:[%s6] sm:$0xf]
    %v837 = vld [vmem:[%s6 + $0x4] sm:$0xf]
    %v838 = vpack.c.bf16 %v833, %v833
    %v839 = vld [vmem:[#allocation10] sm:$0xf]
    %v840 = vld [vmem:[#allocation10 + $0x4] sm:$0xf]
    %v841 = vld [vmem:[#allocation10 + $0x8] sm:$0xf]
    %v842 = vld [vmem:[#allocation10 + $0xc] sm:$0xf]
    %844 = vrot.lane.b32.xlu0 %v838, 96
    %v845 = vpop.permute.xlu0 %844
    %v850 = vunpack.c.l.b16 %v839
    %v851 = vunpack.c.l.b16 %v840
    %v852 = vunpack.c.l.b16 %v841
    %v853 = vunpack.c.l.b16 %v842
    %v854 = vpack.c.b16 %v851, %v850
    %v855 = vpack.c.b16 %v853, %v852
    %v859 = vsel %vm365, %v845, 0
    %861 = vmatpush.bf16.msra.mxu0 0
    %862 = vmatpush.bf16.msra.mxu0 0
    %863 = vmatpush.bf16.msra.mxu0 0
    %864 = vmatpush.bf16.msra.mxu0 0
    %865 = vmatpush.bf16.msra.mxu0 0
    %866 = vmatpush.bf16.msra.mxu0 0
    %867 = vmatpush.bf16.msra.mxu0 %v855
    %868 = vmatpush.bf16.msra.mxu0 %v854
    %869 = vmatmul.bf16.gmra.mxu0 %v859
    %v870 = vpop.f32.mrf.mxu0
    %v871 = vadd.f32 0.0, %v870
    %v872 = vpop.f32.mrf.mxu0
    %873 = vdwg.mxu0
    %v876 = vunpack.c.l.b16 %v836
    %v877 = vunpack.c.l.b16 %v837
    %v878 = vpack.c.b16 %v877, %v876
    %vm880 = vcmask 130048
    %v882 = vsel %vm880, %v835, 0
    %884 = vmatpush.bf16.msra.mxu0 0
    %885 = vmatpush.bf16.msra.mxu0 0
    %886 = vmatpush.bf16.msra.mxu0 0
    %887 = vmatpush.bf16.msra.mxu0 0
    %888 = vmatpush.bf16.msra.mxu0 0
    %889 = vmatpush.bf16.msra.mxu0 0
    %890 = vmatpush.bf16.msra.mxu0 0
    %891 = vmatpush.bf16.msra.mxu0 %v878
    %892 = vmatmul.bf16.gmra.mxu0 %v882
    %v893 = vpop.f32.mrf.mxu0
    %v894 = vadd.f32 %v871, %v893
    %v895 = vpop.f32.mrf.mxu0
    %896 = vdwg.mxu0
    %v897 = vld [vmem:[#allocation11] sm:$0x1]
    %v899 = vperm.slane %v897, 0
    %v901 = vadd.f32 %v894, %v899
    %vm902 = vcmask 123904
    %903 = vst.msk [vmem:[#allocation14] sm:$0x3] %vm902, %v901
    %905 = vrot.lane.b32.xlu0 %v901, 112
    %v906 = vpop.permute.xlu0 %905
    %908 = vst.msk [vmem:[#allocation16] sm:$0x3] %vm902, %v906
    %v909 = vmul.f32 %v901, 0.5
    %v910 = vmul.f32 %v909, 1.442695
    %v911 = vpow.pop %v910
    %v912 = vld [vmem:[%s9] sm:$0x3]
    %914 = vrot.lane.b32.xlu0 %v912, 16
    %v915 = vpop.permute.xlu0 %914
    %v917 = vmul.f32 %v911, %v915
    %919 = vrot.lane.b32.xlu0 %v917, 112
    %v920 = vpop.permute.xlu0 %919
    %v922 = vadd.f32 %v901, %v920
    %923 = vst.msk [vmem:[#allocation13] sm:$0x3] %vm902, %v922
    // Predicated region
    $region66: #{stochastic_gaussian_actor_forward.1} parent=1 // pred_check
      _
    $region67: #{stochastic_gaussian_actor_forward.1} parent=1 // pred_check_branch
      %925 = sbr.rel (0) target = $region69
    $region68: #{stochastic_gaussian_actor_forward.1} parent=1 // pred_region
      %927 = vsyncadd [#allocation4], 0
      %s929 = sshll.u32 [#allocation13], 4
      %s930 = int_to_ptr.vmem [resolvable:$true] %s929
      %s931 = sshll.u32 %s10, 4
      %s932 = int_to_ptr.hbm [resolvable:$true] %s931
      %934 = dma.vmem_to_hbm [thread:$0]  %s930, 32, %s932, [#allocation4]
    $region69: #{stochastic_gaussian_actor_forward.1} parent=1 // pred_fallthru
      _
    // Predicated region
    $region70: #{stochastic_gaussian_actor_forward.1} parent=1 // pred_check
      _
    $region71: #{stochastic_gaussian_actor_forward.1} parent=1 // pred_check_branch
      %936 = sbr.rel (0) target = $region73
    $region72: #{stochastic_gaussian_actor_forward.1} parent=1 // pred_region
      %938 = vsyncadd [#allocation15], 0
      %s940 = sshll.u32 [#allocation14], 4
      %s941 = int_to_ptr.vmem [resolvable:$true] %s940
      %s942 = sshll.u32 %s11, 4
      %s943 = int_to_ptr.hbm [resolvable:$true] %s942
      %945 = dma.vmem_to_hbm [thread:$0]  %s941, 32, %s943, [#allocation15]
    $region73: #{stochastic_gaussian_actor_forward.1} parent=1 // pred_fallthru
      _
    // Predicated region
    $region74: #{stochastic_gaussian_actor_forward.1} parent=1 // pred_check
      _
    $region75: #{stochastic_gaussian_actor_forward.1} parent=1 // pred_check_branch
      %947 = sbr.rel (0) target = $region77
    $region76: #{stochastic_gaussian_actor_forward.1} parent=1 // pred_region
      %949 = vsyncadd [#allocation15], 0
      %s951 = sshll.u32 [#allocation16], 4
      %s952 = int_to_ptr.vmem [resolvable:$true] %s951
      %s953 = sshll.u32 %s12, 4
      %s954 = int_to_ptr.hbm [resolvable:$true] %s953
      %956 = dma.vmem_to_hbm [thread:$0]  %s952, 32, %s954, [#allocation15]
    $region77: #{stochastic_gaussian_actor_forward.1} parent=1 // pred_fallthru
      _
    // Predicated region
    $region78: #{stochastic_gaussian_actor_forward.1} parent=1 // pred_check
      _
    $region79: #{stochastic_gaussian_actor_forward.1} parent=1 // pred_check_branch
      %958 = sbr.rel (0) target = $region81
    $region80: #{stochastic_gaussian_actor_forward.1} parent=1 // pred_region
      %960 = dma.done [#allocation4], 32
    $region81: #{stochastic_gaussian_actor_forward.1} parent=1 // pred_fallthru
      _
    // Predicated region
    $region82: #{stochastic_gaussian_actor_forward.1} parent=1 // pred_check
      _
    $region83: #{stochastic_gaussian_actor_forward.1} parent=1 // pred_check_branch
      %962 = sbr.rel (0) target = $region85
    $region84: #{stochastic_gaussian_actor_forward.1} parent=1 // pred_region
      %964 = dma.done [#allocation15], 32
    $region85: #{stochastic_gaussian_actor_forward.1} parent=1 // pred_fallthru
      _
    // Predicated region
    $region86: #{stochastic_gaussian_actor_forward.1} parent=1 // pred_check
      _
    $region87: #{stochastic_gaussian_actor_forward.1} parent=1 // pred_check_branch
      %966 = sbr.rel (0) target = $region89
    $region88: #{stochastic_gaussian_actor_forward.1} parent=1 // pred_region
      %968 = dma.done [#allocation15], 32
    $region89: #{stochastic_gaussian_actor_forward.1} parent=1 // pred_fallthru
      _
    %969 = vsyncpa [#allocation3], 1
    %970 = vsyncpa [#allocation6], 1
    %971 = vsyncpa [#allocation9], 1
    %972 = vsyncpa [#allocation12], 1
    %973 = vsyncpa [#allocation4], 1
    %974 = vsyncpa [#allocation15], 1

</llo_original>
